<compile_context>
chip_gen: v7x
topology: tpu7x:2x2x1
jax: 0.10.0
libtpu: 0.0.40
codegen_flags: <defaults>
</compile_context>

<pallas_src>
import math

import jax
import jax.numpy as jnp
from jax.experimental import pallas as pl
from jax.experimental.pallas import tpu as pltpu

# Small synthetic config consistent with the module's forward (BERT-style).
BATCH = 2
SEQ = 8
HIDDEN = 32
NUM_HEADS = 2
HEAD_DIM = HIDDEN // NUM_HEADS
FFN = 4 * HIDDEN              # 128
NUM_LAYERS = 2
VOCAB = 100
NUM_CLASSES = 2               # nn.Linear(hidden_size, 2)
LN_EPS = 1e-12

H_PAD = 128                   # lane-padded hidden width (one full vreg lane span)
SCALE = 1.0 / math.sqrt(HEAD_DIM)


# --------------------------------- kernel ------------------------------------
def fused_encoder_kernel(x_ref, mask_ref, emb_g_ref, emb_b_ref,
                         wqkv_ref, bqkv_ref, wo_ref, bo_ref,
                         ln1g_ref, ln1b_ref, w1_ref, b1_ref, w2_ref, b2_ref,
                         ln2g_ref, ln2b_ref, fc_w_ref, fc_b_ref, out_ref):
    """Whole forward: embed-LN -> NUM_LAYERS post-LN blocks -> fc head.

    Activations are (B*S, H_PAD) f32 with real data in lanes [0, HIDDEN); the
    padded lanes stay exactly zero throughout (LN gammas/betas and weight
    rows/cols are zero-padded), so matmuls need no masking.
    """
    lane = jax.lax.broadcasted_iota(jnp.int32, (1, H_PAD), 1)
    valid = (lane < HIDDEN).astype(jnp.float32)                      # (1, H_PAD)
    head_mask = [
        ((lane >= h * HEAD_DIM) & (lane < (h + 1) * HEAD_DIM)).astype(jnp.float32)
        for h in range(NUM_HEADS)
    ]
    inv_h = 1.0 / HIDDEN

    def layer_norm(x, g, b):
        # Mean / var over the HIDDEN real lanes only (padded lanes are zero).
        mu = jnp.sum(x, axis=-1, keepdims=True) * inv_h
        d = (x - mu) * valid
        var = jnp.sum(d * d, axis=-1, keepdims=True) * inv_h
        return d * jax.lax.rsqrt(var + LN_EPS) * g + b

    mask_add = mask_ref[...]                                         # (BS, BS)
    x = layer_norm(x_ref[...], emb_g_ref[...], emb_b_ref[...])       # (BS, H_PAD)

    for l in range(NUM_LAYERS):                                      # static unroll
        # Fused QKV projection: one MXU push; split is vreg-aligned (0/128/256).
        qkv = jnp.dot(x, wqkv_ref[l], preferred_element_type=jnp.float32) + bqkv_ref[l]
        q = qkv[:, 0:H_PAD]
        k = qkv[:, H_PAD:2 * H_PAD]
        v = qkv[:, 2 * H_PAD:3 * H_PAD]

        ctx = jnp.zeros_like(x)
        for h in range(NUM_HEADS):                                   # static unroll
            qh = q * head_mask[h]            # head select via VPU mul, no lane slice
            s = jax.lax.dot_general(qh, k, (((1,), (1,)), ((), ())),
                                    preferred_element_type=jnp.float32)
            s = s * SCALE + mask_add         # key-pad + cross-batch block mask
            m = jnp.max(s, axis=-1, keepdims=True)
            p = jnp.exp(s - m)
            p = p * pl.reciprocal(jnp.sum(p, axis=-1, keepdims=True), approx=True)
            # Heads occupy disjoint lane ranges -> the sum equals concat(heads).
            ctx = ctx + jnp.dot(p, v * head_mask[h],
                                preferred_element_type=jnp.float32)

        attn = jnp.dot(ctx, wo_ref[l], preferred_element_type=jnp.float32) + bo_ref[l]
        h1 = layer_norm(x + attn, ln1g_ref[l], ln1b_ref[l])

        ff = jnp.dot(h1, w1_ref[l], preferred_element_type=jnp.float32) + b1_ref[l]
        # TODO(synk): HF BERT's default activation is exact-erf gelu; tanh approx used.
        ff = jax.nn.gelu(ff, approximate=True)
        ff = jnp.dot(ff, w2_ref[l], preferred_element_type=jnp.float32) + b2_ref[l]
        x = layer_norm(h1 + ff, ln2g_ref[l], ln2b_ref[l])

    # Lane-dense head output: real logits live in lanes [0, NUM_CLASSES).
    out_ref[...] = (jnp.dot(x, fc_w_ref[...], preferred_element_type=jnp.float32)
                    + fc_b_ref[...])


# ------------------------------ parameters -----------------------------------
def init_params(key):
    def normal(k, shape, std=0.02):
        return (std * jax.random.normal(k, shape)).astype(jnp.float32)

    keys = jax.random.split(key, 4 + NUM_LAYERS)
    params = {
        "word_emb": normal(keys[0], (VOCAB, HIDDEN)),
        "pos_emb": normal(keys[1], (SEQ, HIDDEN)),
        "emb_ln_g": jnp.ones((1, HIDDEN), jnp.float32),
        "emb_ln_b": jnp.zeros((1, HIDDEN), jnp.float32),
        "fc_w": normal(keys[2], (HIDDEN, NUM_CLASSES)),
        "fc_b": normal(keys[3], (1, NUM_CLASSES)),
    }
    layers = []
    for l in range(NUM_LAYERS):
        lk = jax.random.split(keys[4 + l], 12)
        layers.append(dict(
            wq=normal(lk[0], (HIDDEN, HIDDEN)), bq=normal(lk[1], (1, HIDDEN)),
            wk=normal(lk[2], (HIDDEN, HIDDEN)), bk=normal(lk[3], (1, HIDDEN)),
            wv=normal(lk[4], (HIDDEN, HIDDEN)), bv=normal(lk[5], (1, HIDDEN)),
            wo=normal(lk[6], (HIDDEN, HIDDEN)), bo=normal(lk[7], (1, HIDDEN)),
            ln1g=jnp.ones((1, HIDDEN), jnp.float32), ln1b=jnp.zeros((1, HIDDEN), jnp.float32),
            w1=normal(lk[8], (HIDDEN, FFN)), b1=normal(lk[9], (1, FFN)),
            w2=normal(lk[10], (FFN, HIDDEN)), b2=normal(lk[11], (1, HIDDEN)),
            ln2g=jnp.ones((1, HIDDEN), jnp.float32), ln2b=jnp.zeros((1, HIDDEN), jnp.float32),
        ))
    params["layers"] = layers
    return params


def _pad_to(a, shape):
    return jnp.pad(a, [(0, t - s) for s, t in zip(a.shape, shape)])


def prepare_kernel_params(params):
    """One-time layout plumbing: zero-pad hidden dims to H_PAD=128 and stack the
    per-layer weights along a leading NUM_LAYERS axis.  Zero padding of LN
    gammas/betas and of weight rows/cols keeps the padded lanes exactly zero
    inside the kernel."""
    L = params["layers"]

    def stack(fn):
        return jnp.stack([fn(lp) for lp in L])

    return {
        "word_emb": _pad_to(params["word_emb"], (VOCAB, H_PAD)),
        "pos_emb": _pad_to(params["pos_emb"], (SEQ, H_PAD)),
        "emb_g": _pad_to(params["emb_ln_g"], (1, H_PAD)),
        "emb_b": _pad_to(params["emb_ln_b"], (1, H_PAD)),
        "wqkv": stack(lambda lp: jnp.concatenate(
            [_pad_to(lp[w], (H_PAD, H_PAD)) for w in ("wq", "wk", "wv")], axis=1)),
        "bqkv": stack(lambda lp: jnp.concatenate(
            [_pad_to(lp[b], (1, H_PAD)) for b in ("bq", "bk", "bv")], axis=1)),
        "wo": stack(lambda lp: _pad_to(lp["wo"], (H_PAD, H_PAD))),
        "bo": stack(lambda lp: _pad_to(lp["bo"], (1, H_PAD))),
        "ln1g": stack(lambda lp: _pad_to(lp["ln1g"], (1, H_PAD))),
        "ln1b": stack(lambda lp: _pad_to(lp["ln1b"], (1, H_PAD))),
        "w1": stack(lambda lp: _pad_to(lp["w1"], (H_PAD, FFN))),
        "b1": stack(lambda lp: lp["b1"]),
        "w2": stack(lambda lp: _pad_to(lp["w2"], (FFN, H_PAD))),
        "b2": stack(lambda lp: _pad_to(lp["b2"], (1, H_PAD))),
        "ln2g": stack(lambda lp: _pad_to(lp["ln2g"], (1, H_PAD))),
        "ln2b": stack(lambda lp: _pad_to(lp["ln2b"], (1, H_PAD))),
        "fc_w": _pad_to(params["fc_w"], (H_PAD, H_PAD)),
        "fc_b": _pad_to(params["fc_b"], (1, H_PAD)),
    }


# -------------------------------- forward ------------------------------------
def forward(kp, input_ids, attention_mask):
    B, S = input_ids.shape
    # Glue: embedding gather (no clean tiny-shape Pallas gather) — tables are
    # pre-padded, so the gathered activation is already lane-padded.
    x = jnp.take(kp["word_emb"], input_ids, axis=0) + kp["pos_emb"][None, :, :]
    x = x.reshape(B * S, H_PAD)

    # Additive attention mask over the flattened (B*S) token axis, built ONCE:
    # 0 where query & key are in the same batch row AND the key is not padding,
    # -1e9 otherwise (blocks cross-batch attention + padded keys).
    batch_ids = jnp.arange(B * S, dtype=jnp.int32) // S
    key_ok = attention_mask.reshape(-1) > 0
    ok = (batch_ids[:, None] == batch_ids[None, :]) & key_ok[None, :]
    mask_add = jnp.where(ok, 0.0, -1e9).astype(jnp.float32)          # (B*S, B*S)

    vmem = pl.BlockSpec(memory_space=pltpu.MemorySpace.VMEM)
    out = pl.pallas_call(
        fused_encoder_kernel,
        out_shape=jax.ShapeDtypeStruct((B * S, H_PAD), jnp.float32),
        in_specs=[vmem] * 18,
        out_specs=vmem,
    )(x, mask_add, kp["emb_g"], kp["emb_b"],
      kp["wqkv"], kp["bqkv"], kp["wo"], kp["bo"],
      kp["ln1g"], kp["ln1b"], kp["w1"], kp["b1"], kp["w2"], kp["b2"],
      kp["ln2g"], kp["ln2b"], kp["fc_w"], kp["fc_b"])

    # torch `.squeeze(-1)` is a no-op (last dim is 2); drop the lane padding.
    return out[:, :NUM_CLASSES].reshape(B, S, NUM_CLASSES)


# -------------------------- pure-JAX reference --------------------------------
def reference_forward(params, input_ids, attention_mask):
    """Plain-jnp reference of the same synthesized encoder (correctness check)."""
    def ln(x, g, b):
        mu = jnp.mean(x, axis=-1, keepdims=True)
        var = jnp.mean(jnp.square(x - mu), axis=-1, keepdims=True)
        return (x - mu) * jax.lax.rsqrt(var + LN_EPS) * g + b

    B, S = input_ids.shape
    x = jnp.take(params["word_emb"], input_ids, axis=0) + params["pos_emb"][None]
    x = ln(x, params["emb_ln_g"], params["emb_ln_b"])
    neg = (1.0 - attention_mask.astype(jnp.float32))[:, None, None, :] * -1e9
    for lp in params["layers"]:
        q = x @ lp["wq"] + lp["bq"]
        k = x @ lp["wk"] + lp["bk"]
        v = x @ lp["wv"] + lp["bv"]

        def split(t):
            return t.reshape(B, S, NUM_HEADS, HEAD_DIM).transpose(0, 2, 1, 3)

        qh, kh, vh = split(q), split(k), split(v)
        s = jnp.einsum("bhqd,bhkd->bhqk", qh, kh) * SCALE + neg
        p = jax.nn.softmax(s, axis=-1)
        ctx = jnp.einsum("bhqk,bhkd->bhqd", p, vh)
        ctx = ctx.transpose(0, 2, 1, 3).reshape(B, S, HIDDEN)
        attn = ctx @ lp["wo"] + lp["bo"]
        h1 = ln(x + attn, lp["ln1g"], lp["ln1b"])
        ff = jax.nn.gelu(h1 @ lp["w1"] + lp["b1"], approximate=True)
        ff = ff @ lp["w2"] + lp["b2"]
        x = ln(h1 + ff, lp["ln2g"], lp["ln2b"])
    return x @ params["fc_w"] + params["fc_b"]


if __name__ == "__main__":
    key = jax.random.PRNGKey(0)
    pkey, ikey = jax.random.split(key)
    params = init_params(pkey)
    kparams = prepare_kernel_params(params)

    input_ids = jax.random.randint(ikey, (BATCH, SEQ), 0, VOCAB, dtype=jnp.int32)
    attention_mask = jnp.ones((BATCH, SEQ), jnp.int32).at[1, 6:].set(0)

    logit = jax.jit(forward)(kparams, input_ids, attention_mask)
    jax.block_until_ready(logit)

    assert logit.shape == (BATCH, SEQ, NUM_CLASSES)
    assert logit.dtype == jnp.float32
    assert bool(jnp.all(jnp.isfinite(logit)))

    ref = reference_forward(params, input_ids, attention_mask)
    err = float(jnp.max(jnp.abs(logit - ref)))
    assert err < 1e-2, f"kernel/reference mismatch: max abs err = {err}"

    print("KERNEL_OK")
</pallas_src>

<mosaic_0001>
module attributes {stable_mosaic.version = 11 : i64} {
  func.func @fused_encoder_kernel(%arg0: memref<16x128xf32, #tpu.memory_space<vmem>>, %arg1: memref<16x16xf32, #tpu.memory_space<vmem>>, %arg2: memref<1x128xf32, #tpu.memory_space<vmem>>, %arg3: memref<1x128xf32, #tpu.memory_space<vmem>>, %arg4: memref<2x128x384xf32, #tpu.memory_space<vmem>>, %arg5: memref<2x1x384xf32, #tpu.memory_space<vmem>>, %arg6: memref<2x128x128xf32, #tpu.memory_space<vmem>>, %arg7: memref<2x1x128xf32, #tpu.memory_space<vmem>>, %arg8: memref<2x1x128xf32, #tpu.memory_space<vmem>>, %arg9: memref<2x1x128xf32, #tpu.memory_space<vmem>>, %arg10: memref<2x128x128xf32, #tpu.memory_space<vmem>>, %arg11: memref<2x1x128xf32, #tpu.memory_space<vmem>>, %arg12: memref<2x128x128xf32, #tpu.memory_space<vmem>>, %arg13: memref<2x1x128xf32, #tpu.memory_space<vmem>>, %arg14: memref<2x1x128xf32, #tpu.memory_space<vmem>>, %arg15: memref<2x1x128xf32, #tpu.memory_space<vmem>>, %arg16: memref<128x128xf32, #tpu.memory_space<vmem>>, %arg17: memref<1x128xf32, #tpu.memory_space<vmem>>, %arg18: memref<16x128xf32, #tpu.memory_space<vmem>>) attributes {dimension_semantics = [], scalar_prefetch = 0 : i64, scratch_operands = 0 : i64, tpu.core_type = #tpu.core_type<tc>} {
    %0 = tpu.iota {dimensions = array<i32: 1>} : vector<1x128xi32>
    %c32_i32 = arith.constant 32 : i32
    %1 = vector.broadcast %c32_i32 : i32 to vector<1x128xi32>
    %2 = arith.cmpi slt, %0, %1 : vector<1x128xi32>
    %3 = arith.extui %2 : vector<1x128xi1> to vector<1x128xi32>
    %4 = arith.sitofp %3 : vector<1x128xi32> to vector<1x128xf32>
    %c0_i32 = arith.constant 0 : i32
    %5 = vector.broadcast %c0_i32 : i32 to vector<1x128xi32>
    %6 = arith.cmpi sge, %0, %5 : vector<1x128xi32>
    %c16_i32 = arith.constant 16 : i32
    %7 = vector.broadcast %c16_i32 : i32 to vector<1x128xi32>
    %8 = arith.cmpi slt, %0, %7 : vector<1x128xi32>
    %9 = arith.andi %6, %8 : vector<1x128xi1>
    %10 = arith.extui %9 : vector<1x128xi1> to vector<1x128xi32>
    %11 = arith.sitofp %10 : vector<1x128xi32> to vector<1x128xf32>
    %c16_i32_0 = arith.constant 16 : i32
    %12 = vector.broadcast %c16_i32_0 : i32 to vector<1x128xi32>
    %13 = arith.cmpi sge, %0, %12 : vector<1x128xi32>
    %c32_i32_1 = arith.constant 32 : i32
    %14 = vector.broadcast %c32_i32_1 : i32 to vector<1x128xi32>
    %15 = arith.cmpi slt, %0, %14 : vector<1x128xi32>
    %16 = arith.andi %13, %15 : vector<1x128xi1>
    %17 = arith.extui %16 : vector<1x128xi1> to vector<1x128xi32>
    %18 = arith.sitofp %17 : vector<1x128xi32> to vector<1x128xf32>
    %c0 = arith.constant 0 : index
    %c0_2 = arith.constant 0 : index
    %19 = vector.load %arg1[%c0, %c0_2] : memref<16x16xf32, #tpu.memory_space<vmem>>, vector<16x16xf32>
    %c0_3 = arith.constant 0 : index
    %c0_4 = arith.constant 0 : index
    %20 = vector.load %arg0[%c0_3, %c0_4] : memref<16x128xf32, #tpu.memory_space<vmem>>, vector<16x128xf32>
    %c0_5 = arith.constant 0 : index
    %c0_6 = arith.constant 0 : index
    %21 = vector.load %arg2[%c0_5, %c0_6] : memref<1x128xf32, #tpu.memory_space<vmem>>, vector<1x128xf32>
    %c0_7 = arith.constant 0 : index
    %c0_8 = arith.constant 0 : index
    %22 = vector.load %arg3[%c0_7, %c0_8] : memref<1x128xf32, #tpu.memory_space<vmem>>, vector<1x128xf32>
    %cst = arith.constant dense<0.000000e+00> : vector<16xf32>
    %23 = vector.multi_reduction <add>, %20, %cst [1] : vector<16x128xf32> to vector<16xf32>
    %24 = vector.shape_cast %23 : vector<16xf32> to vector<16x1xf32>
    %cst_9 = arith.constant 3.125000e-02 : f32
    %25 = vector.broadcast %cst_9 : f32 to vector<16x1xf32>
    %26 = arith.mulf %24, %25 : vector<16x1xf32>
    %27 = vector.broadcast %26 : vector<16x1xf32> to vector<16x128xf32>
    %28 = arith.subf %20, %27 : vector<16x128xf32>
    %29 = vector.broadcast %4 : vector<1x128xf32> to vector<16x128xf32>
    %30 = arith.mulf %28, %29 : vector<16x128xf32>
    %31 = arith.mulf %30, %30 : vector<16x128xf32>
    %cst_10 = arith.constant dense<0.000000e+00> : vector<16xf32>
    %32 = vector.multi_reduction <add>, %31, %cst_10 [1] : vector<16x128xf32> to vector<16xf32>
    %33 = vector.shape_cast %32 : vector<16xf32> to vector<16x1xf32>
    %cst_11 = arith.constant 3.125000e-02 : f32
    %34 = vector.broadcast %cst_11 : f32 to vector<16x1xf32>
    %35 = arith.mulf %33, %34 : vector<16x1xf32>
    %cst_12 = arith.constant 9.99999996E-13 : f32
    %36 = vector.broadcast %cst_12 : f32 to vector<16x1xf32>
    %37 = arith.addf %35, %36 : vector<16x1xf32>
    %38 = math.rsqrt %37 : vector<16x1xf32>
    %39 = vector.broadcast %38 : vector<16x1xf32> to vector<16x128xf32>
    %40 = arith.mulf %30, %39 : vector<16x128xf32>
    %41 = vector.broadcast %21 : vector<1x128xf32> to vector<16x128xf32>
    %42 = arith.mulf %40, %41 : vector<16x128xf32>
    %43 = vector.broadcast %22 : vector<1x128xf32> to vector<16x128xf32>
    %44 = arith.addf %42, %43 : vector<16x128xf32>
    %c0_13 = arith.constant 0 : index
    %c0_14 = arith.constant 0 : index
    %c0_15 = arith.constant 0 : index
    %45 = vector.load %arg4[%c0_13, %c0_14, %c0_15] : memref<2x128x384xf32, #tpu.memory_space<vmem>>, vector<1x128x384xf32>
    %46 = vector.shape_cast %45 : vector<1x128x384xf32> to vector<128x384xf32>
    %cst_16 = arith.constant dense<0.000000e+00> : vector<16x384xf32>
    %47 = tpu.matmul %44, %46, %cst_16 {dimension_numbers = #tpu.dot_dimension_numbers<[1], [0], [0], [1], [0, 0, 1, 1], [], []>} : vector<16x128xf32>, vector<128x384xf32>, vector<16x384xf32> -> vector<16x384xf32>
    %c0_17 = arith.constant 0 : index
    %c0_18 = arith.constant 0 : index
    %c0_19 = arith.constant 0 : index
    %48 = vector.load %arg5[%c0_17, %c0_18, %c0_19] : memref<2x1x384xf32, #tpu.memory_space<vmem>>, vector<1x1x384xf32>
    %49 = vector.shape_cast %48 : vector<1x1x384xf32> to vector<1x384xf32>
    %50 = vector.broadcast %49 : vector<1x384xf32> to vector<16x384xf32>
    %51 = arith.addf %47, %50 : vector<16x384xf32>
    %52 = vector.extract_strided_slice %51 {offsets = [0, 0], sizes = [16, 128], strides = [1, 1]} : vector<16x384xf32> to vector<16x128xf32>
    %53 = vector.extract_strided_slice %51 {offsets = [0, 128], sizes = [16, 128], strides = [1, 1]} : vector<16x384xf32> to vector<16x128xf32>
    %54 = vector.extract_strided_slice %51 {offsets = [0, 256], sizes = [16, 128], strides = [1, 1]} : vector<16x384xf32> to vector<16x128xf32>
    %cst_20 = arith.constant 0.000000e+00 : f32
    %55 = vector.broadcast %cst_20 : f32 to vector<16x128xf32>
    %56 = vector.broadcast %11 : vector<1x128xf32> to vector<16x128xf32>
    %57 = arith.mulf %52, %56 : vector<16x128xf32>
    %cst_21 = arith.constant dense<0.000000e+00> : vector<16x16xf32>
    %58 = tpu.matmul %57, %53, %cst_21 {dimension_numbers = #tpu.dot_dimension_numbers<[1], [1], [0], [0], [0, 0, 1, 0], [], []>} : vector<16x128xf32>, vector<16x128xf32>, vector<16x16xf32> -> vector<16x16xf32>
    %cst_22 = arith.constant 2.500000e-01 : f32
    %59 = vector.broadcast %cst_22 : f32 to vector<16x16xf32>
    %60 = arith.mulf %58, %59 : vector<16x16xf32>
    %61 = arith.addf %60, %19 : vector<16x16xf32>
    %cst_23 = arith.constant dense<0xFF800000> : vector<16xf32>
    %62 = vector.multi_reduction <maximumf>, %61, %cst_23 [1] : vector<16x16xf32> to vector<16xf32>
    %63 = vector.shape_cast %62 : vector<16xf32> to vector<16x1xf32>
    %64 = vector.broadcast %63 : vector<16x1xf32> to vector<16x16xf32>
    %65 = arith.subf %61, %64 : vector<16x16xf32>
    %66 = math.exp %65 : vector<16x16xf32>
    %cst_24 = arith.constant dense<0.000000e+00> : vector<16xf32>
    %67 = vector.multi_reduction <add>, %66, %cst_24 [1] : vector<16x16xf32> to vector<16xf32>
    %68 = vector.shape_cast %67 : vector<16xf32> to vector<16x1xf32>
    %69 = tpu.reciprocal %68 {approx = true} : vector<16x1xf32> -> vector<16x1xf32>
    %70 = vector.broadcast %69 : vector<16x1xf32> to vector<16x16xf32>
    %71 = arith.mulf %66, %70 : vector<16x16xf32>
    %72 = vector.broadcast %11 : vector<1x128xf32> to vector<16x128xf32>
    %73 = arith.mulf %54, %72 : vector<16x128xf32>
    %cst_25 = arith.constant dense<0.000000e+00> : vector<16x128xf32>
    %74 = tpu.matmul %71, %73, %cst_25 {dimension_numbers = #tpu.dot_dimension_numbers<[1], [0], [0], [1], [0, 0, 1, 1], [], []>} : vector<16x16xf32>, vector<16x128xf32>, vector<16x128xf32> -> vector<16x128xf32>
    %75 = arith.addf %55, %74 : vector<16x128xf32>
    %76 = vector.broadcast %18 : vector<1x128xf32> to vector<16x128xf32>
    %77 = arith.mulf %52, %76 : vector<16x128xf32>
    %cst_26 = arith.constant dense<0.000000e+00> : vector<16x16xf32>
    %78 = tpu.matmul %77, %53, %cst_26 {dimension_numbers = #tpu.dot_dimension_numbers<[1], [1], [0], [0], [0, 0, 1, 0], [], []>} : vector<16x128xf32>, vector<16x128xf32>, vector<16x16xf32> -> vector<16x16xf32>
    %cst_27 = arith.constant 2.500000e-01 : f32
    %79 = vector.broadcast %cst_27 : f32 to vector<16x16xf32>
    %80 = arith.mulf %78, %79 : vector<16x16xf32>
    %81 = arith.addf %80, %19 : vector<16x16xf32>
    %cst_28 = arith.constant dense<0xFF800000> : vector<16xf32>
    %82 = vector.multi_reduction <maximumf>, %81, %cst_28 [1] : vector<16x16xf32> to vector<16xf32>
    %83 = vector.shape_cast %82 : vector<16xf32> to vector<16x1xf32>
    %84 = vector.broadcast %83 : vector<16x1xf32> to vector<16x16xf32>
    %85 = arith.subf %81, %84 : vector<16x16xf32>
    %86 = math.exp %85 : vector<16x16xf32>
    %cst_29 = arith.constant dense<0.000000e+00> : vector<16xf32>
    %87 = vector.multi_reduction <add>, %86, %cst_29 [1] : vector<16x16xf32> to vector<16xf32>
    %88 = vector.shape_cast %87 : vector<16xf32> to vector<16x1xf32>
    %89 = tpu.reciprocal %88 {approx = true} : vector<16x1xf32> -> vector<16x1xf32>
    %90 = vector.broadcast %89 : vector<16x1xf32> to vector<16x16xf32>
    %91 = arith.mulf %86, %90 : vector<16x16xf32>
    %92 = vector.broadcast %18 : vector<1x128xf32> to vector<16x128xf32>
    %93 = arith.mulf %54, %92 : vector<16x128xf32>
    %cst_30 = arith.constant dense<0.000000e+00> : vector<16x128xf32>
    %94 = tpu.matmul %91, %93, %cst_30 {dimension_numbers = #tpu.dot_dimension_numbers<[1], [0], [0], [1], [0, 0, 1, 1], [], []>} : vector<16x16xf32>, vector<16x128xf32>, vector<16x128xf32> -> vector<16x128xf32>
    %95 = arith.addf %75, %94 : vector<16x128xf32>
    %c0_31 = arith.constant 0 : index
    %c0_32 = arith.constant 0 : index
    %c0_33 = arith.constant 0 : index
    %96 = vector.load %arg6[%c0_31, %c0_32, %c0_33] : memref<2x128x128xf32, #tpu.memory_space<vmem>>, vector<1x128x128xf32>
    %97 = vector.shape_cast %96 : vector<1x128x128xf32> to vector<128x128xf32>
    %cst_34 = arith.constant dense<0.000000e+00> : vector<16x128xf32>
    %98 = tpu.matmul %95, %97, %cst_34 {dimension_numbers = #tpu.dot_dimension_numbers<[1], [0], [0], [1], [0, 0, 1, 1], [], []>} : vector<16x128xf32>, vector<128x128xf32>, vector<16x128xf32> -> vector<16x128xf32>
    %c0_35 = arith.constant 0 : index
    %c0_36 = arith.constant 0 : index
    %c0_37 = arith.constant 0 : index
    %99 = vector.load %arg7[%c0_35, %c0_36, %c0_37] : memref<2x1x128xf32, #tpu.memory_space<vmem>>, vector<1x1x128xf32>
    %100 = vector.shape_cast %99 : vector<1x1x128xf32> to vector<1x128xf32>
    %101 = vector.broadcast %100 : vector<1x128xf32> to vector<16x128xf32>
    %102 = arith.addf %98, %101 : vector<16x128xf32>
    %103 = arith.addf %44, %102 : vector<16x128xf32>
    %c0_38 = arith.constant 0 : index
    %c0_39 = arith.constant 0 : index
    %c0_40 = arith.constant 0 : index
    %104 = vector.load %arg8[%c0_38, %c0_39, %c0_40] : memref<2x1x128xf32, #tpu.memory_space<vmem>>, vector<1x1x128xf32>
    %105 = vector.shape_cast %104 : vector<1x1x128xf32> to vector<1x128xf32>
    %c0_41 = arith.constant 0 : index
    %c0_42 = arith.constant 0 : index
    %c0_43 = arith.constant 0 : index
    %106 = vector.load %arg9[%c0_41, %c0_42, %c0_43] : memref<2x1x128xf32, #tpu.memory_space<vmem>>, vector<1x1x128xf32>
    %107 = vector.shape_cast %106 : vector<1x1x128xf32> to vector<1x128xf32>
    %cst_44 = arith.constant dense<0.000000e+00> : vector<16xf32>
    %108 = vector.multi_reduction <add>, %103, %cst_44 [1] : vector<16x128xf32> to vector<16xf32>
    %109 = vector.shape_cast %108 : vector<16xf32> to vector<16x1xf32>
    %cst_45 = arith.constant 3.125000e-02 : f32
    %110 = vector.broadcast %cst_45 : f32 to vector<16x1xf32>
    %111 = arith.mulf %109, %110 : vector<16x1xf32>
    %112 = vector.broadcast %111 : vector<16x1xf32> to vector<16x128xf32>
    %113 = arith.subf %103, %112 : vector<16x128xf32>
    %114 = vector.broadcast %4 : vector<1x128xf32> to vector<16x128xf32>
    %115 = arith.mulf %113, %114 : vector<16x128xf32>
    %116 = arith.mulf %115, %115 : vector<16x128xf32>
    %cst_46 = arith.constant dense<0.000000e+00> : vector<16xf32>
    %117 = vector.multi_reduction <add>, %116, %cst_46 [1] : vector<16x128xf32> to vector<16xf32>
    %118 = vector.shape_cast %117 : vector<16xf32> to vector<16x1xf32>
    %cst_47 = arith.constant 3.125000e-02 : f32
    %119 = vector.broadcast %cst_47 : f32 to vector<16x1xf32>
    %120 = arith.mulf %118, %119 : vector<16x1xf32>
    %cst_48 = arith.constant 9.99999996E-13 : f32
    %121 = vector.broadcast %cst_48 : f32 to vector<16x1xf32>
    %122 = arith.addf %120, %121 : vector<16x1xf32>
    %123 = math.rsqrt %122 : vector<16x1xf32>
    %124 = vector.broadcast %123 : vector<16x1xf32> to vector<16x128xf32>
    %125 = arith.mulf %115, %124 : vector<16x128xf32>
    %126 = vector.broadcast %105 : vector<1x128xf32> to vector<16x128xf32>
    %127 = arith.mulf %125, %126 : vector<16x128xf32>
    %128 = vector.broadcast %107 : vector<1x128xf32> to vector<16x128xf32>
    %129 = arith.addf %127, %128 : vector<16x128xf32>
    %c0_49 = arith.constant 0 : index
    %c0_50 = arith.constant 0 : index
    %c0_51 = arith.constant 0 : index
    %130 = vector.load %arg10[%c0_49, %c0_50, %c0_51] : memref<2x128x128xf32, #tpu.memory_space<vmem>>, vector<1x128x128xf32>
    %131 = vector.shape_cast %130 : vector<1x128x128xf32> to vector<128x128xf32>
    %cst_52 = arith.constant dense<0.000000e+00> : vector<16x128xf32>
    %132 = tpu.matmul %129, %131, %cst_52 {dimension_numbers = #tpu.dot_dimension_numbers<[1], [0], [0], [1], [0, 0, 1, 1], [], []>} : vector<16x128xf32>, vector<128x128xf32>, vector<16x128xf32> -> vector<16x128xf32>
    %c0_53 = arith.constant 0 : index
    %c0_54 = arith.constant 0 : index
    %c0_55 = arith.constant 0 : index
    %133 = vector.load %arg11[%c0_53, %c0_54, %c0_55] : memref<2x1x128xf32, #tpu.memory_space<vmem>>, vector<1x1x128xf32>
    %134 = vector.shape_cast %133 : vector<1x1x128xf32> to vector<1x128xf32>
    %135 = vector.broadcast %134 : vector<1x128xf32> to vector<16x128xf32>
    %136 = arith.addf %132, %135 : vector<16x128xf32>
    %137 = arith.mulf %136, %136 : vector<16x128xf32>
    %138 = arith.mulf %136, %137 : vector<16x128xf32>
    %cst_56 = arith.constant 4.471500e-02 : f32
    %139 = vector.broadcast %cst_56 : f32 to vector<16x128xf32>
    %140 = arith.mulf %139, %138 : vector<16x128xf32>
    %141 = arith.addf %136, %140 : vector<16x128xf32>
    %cst_57 = arith.constant 0.797884583 : f32
    %142 = vector.broadcast %cst_57 : f32 to vector<16x128xf32>
    %143 = arith.mulf %142, %141 : vector<16x128xf32>
    %144 = math.tanh %143 : vector<16x128xf32>
    %cst_58 = arith.constant 1.000000e+00 : f32
    %145 = vector.broadcast %cst_58 : f32 to vector<16x128xf32>
    %146 = arith.addf %145, %144 : vector<16x128xf32>
    %cst_59 = arith.constant 5.000000e-01 : f32
    %147 = vector.broadcast %cst_59 : f32 to vector<16x128xf32>
    %148 = arith.mulf %147, %146 : vector<16x128xf32>
    %149 = arith.mulf %136, %148 : vector<16x128xf32>
    %c0_60 = arith.constant 0 : index
    %c0_61 = arith.constant 0 : index
    %c0_62 = arith.constant 0 : index
    %150 = vector.load %arg12[%c0_60, %c0_61, %c0_62] : memref<2x128x128xf32, #tpu.memory_space<vmem>>, vector<1x128x128xf32>
    %151 = vector.shape_cast %150 : vector<1x128x128xf32> to vector<128x128xf32>
    %cst_63 = arith.constant dense<0.000000e+00> : vector<16x128xf32>
    %152 = tpu.matmul %149, %151, %cst_63 {dimension_numbers = #tpu.dot_dimension_numbers<[1], [0], [0], [1], [0, 0, 1, 1], [], []>} : vector<16x128xf32>, vector<128x128xf32>, vector<16x128xf32> -> vector<16x128xf32>
    %c0_64 = arith.constant 0 : index
    %c0_65 = arith.constant 0 : index
    %c0_66 = arith.constant 0 : index
    %153 = vector.load %arg13[%c0_64, %c0_65, %c0_66] : memref<2x1x128xf32, #tpu.memory_space<vmem>>, vector<1x1x128xf32>
    %154 = vector.shape_cast %153 : vector<1x1x128xf32> to vector<1x128xf32>
    %155 = vector.broadcast %154 : vector<1x128xf32> to vector<16x128xf32>
    %156 = arith.addf %152, %155 : vector<16x128xf32>
    %157 = arith.addf %129, %156 : vector<16x128xf32>
    %c0_67 = arith.constant 0 : index
    %c0_68 = arith.constant 0 : index
    %c0_69 = arith.constant 0 : index
    %158 = vector.load %arg14[%c0_67, %c0_68, %c0_69] : memref<2x1x128xf32, #tpu.memory_space<vmem>>, vector<1x1x128xf32>
    %159 = vector.shape_cast %158 : vector<1x1x128xf32> to vector<1x128xf32>
    %c0_70 = arith.constant 0 : index
    %c0_71 = arith.constant 0 : index
    %c0_72 = arith.constant 0 : index
    %160 = vector.load %arg15[%c0_70, %c0_71, %c0_72] : memref<2x1x128xf32, #tpu.memory_space<vmem>>, vector<1x1x128xf32>
    %161 = vector.shape_cast %160 : vector<1x1x128xf32> to vector<1x128xf32>
    %cst_73 = arith.constant dense<0.000000e+00> : vector<16xf32>
    %162 = vector.multi_reduction <add>, %157, %cst_73 [1] : vector<16x128xf32> to vector<16xf32>
    %163 = vector.shape_cast %162 : vector<16xf32> to vector<16x1xf32>
    %cst_74 = arith.constant 3.125000e-02 : f32
    %164 = vector.broadcast %cst_74 : f32 to vector<16x1xf32>
    %165 = arith.mulf %163, %164 : vector<16x1xf32>
    %166 = vector.broadcast %165 : vector<16x1xf32> to vector<16x128xf32>
    %167 = arith.subf %157, %166 : vector<16x128xf32>
    %168 = vector.broadcast %4 : vector<1x128xf32> to vector<16x128xf32>
    %169 = arith.mulf %167, %168 : vector<16x128xf32>
    %170 = arith.mulf %169, %169 : vector<16x128xf32>
    %cst_75 = arith.constant dense<0.000000e+00> : vector<16xf32>
    %171 = vector.multi_reduction <add>, %170, %cst_75 [1] : vector<16x128xf32> to vector<16xf32>
    %172 = vector.shape_cast %171 : vector<16xf32> to vector<16x1xf32>
    %cst_76 = arith.constant 3.125000e-02 : f32
    %173 = vector.broadcast %cst_76 : f32 to vector<16x1xf32>
    %174 = arith.mulf %172, %173 : vector<16x1xf32>
    %cst_77 = arith.constant 9.99999996E-13 : f32
    %175 = vector.broadcast %cst_77 : f32 to vector<16x1xf32>
    %176 = arith.addf %174, %175 : vector<16x1xf32>
    %177 = math.rsqrt %176 : vector<16x1xf32>
    %178 = vector.broadcast %177 : vector<16x1xf32> to vector<16x128xf32>
    %179 = arith.mulf %169, %178 : vector<16x128xf32>
    %180 = vector.broadcast %159 : vector<1x128xf32> to vector<16x128xf32>
    %181 = arith.mulf %179, %180 : vector<16x128xf32>
    %182 = vector.broadcast %161 : vector<1x128xf32> to vector<16x128xf32>
    %183 = arith.addf %181, %182 : vector<16x128xf32>
    %c1 = arith.constant 1 : index
    %c0_78 = arith.constant 0 : index
    %c0_79 = arith.constant 0 : index
    %184 = vector.load %arg4[%c1, %c0_78, %c0_79] : memref<2x128x384xf32, #tpu.memory_space<vmem>>, vector<1x128x384xf32>
    %185 = vector.shape_cast %184 : vector<1x128x384xf32> to vector<128x384xf32>
    %cst_80 = arith.constant dense<0.000000e+00> : vector<16x384xf32>
    %186 = tpu.matmul %183, %185, %cst_80 {dimension_numbers = #tpu.dot_dimension_numbers<[1], [0], [0], [1], [0, 0, 1, 1], [], []>} : vector<16x128xf32>, vector<128x384xf32>, vector<16x384xf32> -> vector<16x384xf32>
    %c1_81 = arith.constant 1 : index
    %c0_82 = arith.constant 0 : index
    %c0_83 = arith.constant 0 : index
    %187 = vector.load %arg5[%c1_81, %c0_82, %c0_83] : memref<2x1x384xf32, #tpu.memory_space<vmem>>, vector<1x1x384xf32>
    %188 = vector.shape_cast %187 : vector<1x1x384xf32> to vector<1x384xf32>
    %189 = vector.broadcast %188 : vector<1x384xf32> to vector<16x384xf32>
    %190 = arith.addf %186, %189 : vector<16x384xf32>
    %191 = vector.extract_strided_slice %190 {offsets = [0, 0], sizes = [16, 128], strides = [1, 1]} : vector<16x384xf32> to vector<16x128xf32>
    %192 = vector.extract_strided_slice %190 {offsets = [0, 128], sizes = [16, 128], strides = [1, 1]} : vector<16x384xf32> to vector<16x128xf32>
    %193 = vector.extract_strided_slice %190 {offsets = [0, 256], sizes = [16, 128], strides = [1, 1]} : vector<16x384xf32> to vector<16x128xf32>
    %cst_84 = arith.constant 0.000000e+00 : f32
    %194 = vector.broadcast %cst_84 : f32 to vector<16x128xf32>
    %195 = vector.broadcast %11 : vector<1x128xf32> to vector<16x128xf32>
    %196 = arith.mulf %191, %195 : vector<16x128xf32>
    %cst_85 = arith.constant dense<0.000000e+00> : vector<16x16xf32>
    %197 = tpu.matmul %196, %192, %cst_85 {dimension_numbers = #tpu.dot_dimension_numbers<[1], [1], [0], [0], [0, 0, 1, 0], [], []>} : vector<16x128xf32>, vector<16x128xf32>, vector<16x16xf32> -> vector<16x16xf32>
    %cst_86 = arith.constant 2.500000e-01 : f32
    %198 = vector.broadcast %cst_86 : f32 to vector<16x16xf32>
    %199 = arith.mulf %197, %198 : vector<16x16xf32>
    %200 = arith.addf %199, %19 : vector<16x16xf32>
    %cst_87 = arith.constant dense<0xFF800000> : vector<16xf32>
    %201 = vector.multi_reduction <maximumf>, %200, %cst_87 [1] : vector<16x16xf32> to vector<16xf32>
    %202 = vector.shape_cast %201 : vector<16xf32> to vector<16x1xf32>
    %203 = vector.broadcast %202 : vector<16x1xf32> to vector<16x16xf32>
    %204 = arith.subf %200, %203 : vector<16x16xf32>
    %205 = math.exp %204 : vector<16x16xf32>
    %cst_88 = arith.constant dense<0.000000e+00> : vector<16xf32>
    %206 = vector.multi_reduction <add>, %205, %cst_88 [1] : vector<16x16xf32> to vector<16xf32>
    %207 = vector.shape_cast %206 : vector<16xf32> to vector<16x1xf32>
    %208 = tpu.reciprocal %207 {approx = true} : vector<16x1xf32> -> vector<16x1xf32>
    %209 = vector.broadcast %208 : vector<16x1xf32> to vector<16x16xf32>
    %210 = arith.mulf %205, %209 : vector<16x16xf32>
    %211 = vector.broadcast %11 : vector<1x128xf32> to vector<16x128xf32>
    %212 = arith.mulf %193, %211 : vector<16x128xf32>
    %cst_89 = arith.constant dense<0.000000e+00> : vector<16x128xf32>
    %213 = tpu.matmul %210, %212, %cst_89 {dimension_numbers = #tpu.dot_dimension_numbers<[1], [0], [0], [1], [0, 0, 1, 1], [], []>} : vector<16x16xf32>, vector<16x128xf32>, vector<16x128xf32> -> vector<16x128xf32>
    %214 = arith.addf %194, %213 : vector<16x128xf32>
    %215 = vector.broadcast %18 : vector<1x128xf32> to vector<16x128xf32>
    %216 = arith.mulf %191, %215 : vector<16x128xf32>
    %cst_90 = arith.constant dense<0.000000e+00> : vector<16x16xf32>
    %217 = tpu.matmul %216, %192, %cst_90 {dimension_numbers = #tpu.dot_dimension_numbers<[1], [1], [0], [0], [0, 0, 1, 0], [], []>} : vector<16x128xf32>, vector<16x128xf32>, vector<16x16xf32> -> vector<16x16xf32>
    %cst_91 = arith.constant 2.500000e-01 : f32
    %218 = vector.broadcast %cst_91 : f32 to vector<16x16xf32>
    %219 = arith.mulf %217, %218 : vector<16x16xf32>
    %220 = arith.addf %219, %19 : vector<16x16xf32>
    %cst_92 = arith.constant dense<0xFF800000> : vector<16xf32>
    %221 = vector.multi_reduction <maximumf>, %220, %cst_92 [1] : vector<16x16xf32> to vector<16xf32>
    %222 = vector.shape_cast %221 : vector<16xf32> to vector<16x1xf32>
    %223 = vector.broadcast %222 : vector<16x1xf32> to vector<16x16xf32>
    %224 = arith.subf %220, %223 : vector<16x16xf32>
    %225 = math.exp %224 : vector<16x16xf32>
    %cst_93 = arith.constant dense<0.000000e+00> : vector<16xf32>
    %226 = vector.multi_reduction <add>, %225, %cst_93 [1] : vector<16x16xf32> to vector<16xf32>
    %227 = vector.shape_cast %226 : vector<16xf32> to vector<16x1xf32>
    %228 = tpu.reciprocal %227 {approx = true} : vector<16x1xf32> -> vector<16x1xf32>
    %229 = vector.broadcast %228 : vector<16x1xf32> to vector<16x16xf32>
    %230 = arith.mulf %225, %229 : vector<16x16xf32>
    %231 = vector.broadcast %18 : vector<1x128xf32> to vector<16x128xf32>
    %232 = arith.mulf %193, %231 : vector<16x128xf32>
    %cst_94 = arith.constant dense<0.000000e+00> : vector<16x128xf32>
    %233 = tpu.matmul %230, %232, %cst_94 {dimension_numbers = #tpu.dot_dimension_numbers<[1], [0], [0], [1], [0, 0, 1, 1], [], []>} : vector<16x16xf32>, vector<16x128xf32>, vector<16x128xf32> -> vector<16x128xf32>
    %234 = arith.addf %214, %233 : vector<16x128xf32>
    %c1_95 = arith.constant 1 : index
    %c0_96 = arith.constant 0 : index
    %c0_97 = arith.constant 0 : index
    %235 = vector.load %arg6[%c1_95, %c0_96, %c0_97] : memref<2x128x128xf32, #tpu.memory_space<vmem>>, vector<1x128x128xf32>
    %236 = vector.shape_cast %235 : vector<1x128x128xf32> to vector<128x128xf32>
    %cst_98 = arith.constant dense<0.000000e+00> : vector<16x128xf32>
    %237 = tpu.matmul %234, %236, %cst_98 {dimension_numbers = #tpu.dot_dimension_numbers<[1], [0], [0], [1], [0, 0, 1, 1], [], []>} : vector<16x128xf32>, vector<128x128xf32>, vector<16x128xf32> -> vector<16x128xf32>
    %c1_99 = arith.constant 1 : index
    %c0_100 = arith.constant 0 : index
    %c0_101 = arith.constant 0 : index
    %238 = vector.load %arg7[%c1_99, %c0_100, %c0_101] : memref<2x1x128xf32, #tpu.memory_space<vmem>>, vector<1x1x128xf32>
    %239 = vector.shape_cast %238 : vector<1x1x128xf32> to vector<1x128xf32>
    %240 = vector.broadcast %239 : vector<1x128xf32> to vector<16x128xf32>
    %241 = arith.addf %237, %240 : vector<16x128xf32>
    %242 = arith.addf %183, %241 : vector<16x128xf32>
    %c1_102 = arith.constant 1 : index
    %c0_103 = arith.constant 0 : index
    %c0_104 = arith.constant 0 : index
    %243 = vector.load %arg8[%c1_102, %c0_103, %c0_104] : memref<2x1x128xf32, #tpu.memory_space<vmem>>, vector<1x1x128xf32>
    %244 = vector.shape_cast %243 : vector<1x1x128xf32> to vector<1x128xf32>
    %c1_105 = arith.constant 1 : index
    %c0_106 = arith.constant 0 : index
    %c0_107 = arith.constant 0 : index
    %245 = vector.load %arg9[%c1_105, %c0_106, %c0_107] : memref<2x1x128xf32, #tpu.memory_space<vmem>>, vector<1x1x128xf32>
    %246 = vector.shape_cast %245 : vector<1x1x128xf32> to vector<1x128xf32>
    %cst_108 = arith.constant dense<0.000000e+00> : vector<16xf32>
    %247 = vector.multi_reduction <add>, %242, %cst_108 [1] : vector<16x128xf32> to vector<16xf32>
    %248 = vector.shape_cast %247 : vector<16xf32> to vector<16x1xf32>
    %cst_109 = arith.constant 3.125000e-02 : f32
    %249 = vector.broadcast %cst_109 : f32 to vector<16x1xf32>
    %250 = arith.mulf %248, %249 : vector<16x1xf32>
    %251 = vector.broadcast %250 : vector<16x1xf32> to vector<16x128xf32>
    %252 = arith.subf %242, %251 : vector<16x128xf32>
    %253 = vector.broadcast %4 : vector<1x128xf32> to vector<16x128xf32>
    %254 = arith.mulf %252, %253 : vector<16x128xf32>
    %255 = arith.mulf %254, %254 : vector<16x128xf32>
    %cst_110 = arith.constant dense<0.000000e+00> : vector<16xf32>
    %256 = vector.multi_reduction <add>, %255, %cst_110 [1] : vector<16x128xf32> to vector<16xf32>
    %257 = vector.shape_cast %256 : vector<16xf32> to vector<16x1xf32>
    %cst_111 = arith.constant 3.125000e-02 : f32
    %258 = vector.broadcast %cst_111 : f32 to vector<16x1xf32>
    %259 = arith.mulf %257, %258 : vector<16x1xf32>
    %cst_112 = arith.constant 9.99999996E-13 : f32
    %260 = vector.broadcast %cst_112 : f32 to vector<16x1xf32>
    %261 = arith.addf %259, %260 : vector<16x1xf32>
    %262 = math.rsqrt %261 : vector<16x1xf32>
    %263 = vector.broadcast %262 : vector<16x1xf32> to vector<16x128xf32>
    %264 = arith.mulf %254, %263 : vector<16x128xf32>
    %265 = vector.broadcast %244 : vector<1x128xf32> to vector<16x128xf32>
    %266 = arith.mulf %264, %265 : vector<16x128xf32>
    %267 = vector.broadcast %246 : vector<1x128xf32> to vector<16x128xf32>
    %268 = arith.addf %266, %267 : vector<16x128xf32>
    %c1_113 = arith.constant 1 : index
    %c0_114 = arith.constant 0 : index
    %c0_115 = arith.constant 0 : index
    %269 = vector.load %arg10[%c1_113, %c0_114, %c0_115] : memref<2x128x128xf32, #tpu.memory_space<vmem>>, vector<1x128x128xf32>
    %270 = vector.shape_cast %269 : vector<1x128x128xf32> to vector<128x128xf32>
    %cst_116 = arith.constant dense<0.000000e+00> : vector<16x128xf32>
    %271 = tpu.matmul %268, %270, %cst_116 {dimension_numbers = #tpu.dot_dimension_numbers<[1], [0], [0], [1], [0, 0, 1, 1], [], []>} : vector<16x128xf32>, vector<128x128xf32>, vector<16x128xf32> -> vector<16x128xf32>
    %c1_117 = arith.constant 1 : index
    %c0_118 = arith.constant 0 : index
    %c0_119 = arith.constant 0 : index
    %272 = vector.load %arg11[%c1_117, %c0_118, %c0_119] : memref<2x1x128xf32, #tpu.memory_space<vmem>>, vector<1x1x128xf32>
    %273 = vector.shape_cast %272 : vector<1x1x128xf32> to vector<1x128xf32>
    %274 = vector.broadcast %273 : vector<1x128xf32> to vector<16x128xf32>
    %275 = arith.addf %271, %274 : vector<16x128xf32>
    %276 = arith.mulf %275, %275 : vector<16x128xf32>
    %277 = arith.mulf %275, %276 : vector<16x128xf32>
    %cst_120 = arith.constant 4.471500e-02 : f32
    %278 = vector.broadcast %cst_120 : f32 to vector<16x128xf32>
    %279 = arith.mulf %278, %277 : vector<16x128xf32>
    %280 = arith.addf %275, %279 : vector<16x128xf32>
    %cst_121 = arith.constant 0.797884583 : f32
    %281 = vector.broadcast %cst_121 : f32 to vector<16x128xf32>
    %282 = arith.mulf %281, %280 : vector<16x128xf32>
    %283 = math.tanh %282 : vector<16x128xf32>
    %cst_122 = arith.constant 1.000000e+00 : f32
    %284 = vector.broadcast %cst_122 : f32 to vector<16x128xf32>
    %285 = arith.addf %284, %283 : vector<16x128xf32>
    %cst_123 = arith.constant 5.000000e-01 : f32
    %286 = vector.broadcast %cst_123 : f32 to vector<16x128xf32>
    %287 = arith.mulf %286, %285 : vector<16x128xf32>
    %288 = arith.mulf %275, %287 : vector<16x128xf32>
    %c1_124 = arith.constant 1 : index
    %c0_125 = arith.constant 0 : index
    %c0_126 = arith.constant 0 : index
    %289 = vector.load %arg12[%c1_124, %c0_125, %c0_126] : memref<2x128x128xf32, #tpu.memory_space<vmem>>, vector<1x128x128xf32>
    %290 = vector.shape_cast %289 : vector<1x128x128xf32> to vector<128x128xf32>
    %cst_127 = arith.constant dense<0.000000e+00> : vector<16x128xf32>
    %291 = tpu.matmul %288, %290, %cst_127 {dimension_numbers = #tpu.dot_dimension_numbers<[1], [0], [0], [1], [0, 0, 1, 1], [], []>} : vector<16x128xf32>, vector<128x128xf32>, vector<16x128xf32> -> vector<16x128xf32>
    %c1_128 = arith.constant 1 : index
    %c0_129 = arith.constant 0 : index
    %c0_130 = arith.constant 0 : index
    %292 = vector.load %arg13[%c1_128, %c0_129, %c0_130] : memref<2x1x128xf32, #tpu.memory_space<vmem>>, vector<1x1x128xf32>
    %293 = vector.shape_cast %292 : vector<1x1x128xf32> to vector<1x128xf32>
    %294 = vector.broadcast %293 : vector<1x128xf32> to vector<16x128xf32>
    %295 = arith.addf %291, %294 : vector<16x128xf32>
    %296 = arith.addf %268, %295 : vector<16x128xf32>
    %c1_131 = arith.constant 1 : index
    %c0_132 = arith.constant 0 : index
    %c0_133 = arith.constant 0 : index
    %297 = vector.load %arg14[%c1_131, %c0_132, %c0_133] : memref<2x1x128xf32, #tpu.memory_space<vmem>>, vector<1x1x128xf32>
    %298 = vector.shape_cast %297 : vector<1x1x128xf32> to vector<1x128xf32>
    %c1_134 = arith.constant 1 : index
    %c0_135 = arith.constant 0 : index
    %c0_136 = arith.constant 0 : index
    %299 = vector.load %arg15[%c1_134, %c0_135, %c0_136] : memref<2x1x128xf32, #tpu.memory_space<vmem>>, vector<1x1x128xf32>
    %300 = vector.shape_cast %299 : vector<1x1x128xf32> to vector<1x128xf32>
    %cst_137 = arith.constant dense<0.000000e+00> : vector<16xf32>
    %301 = vector.multi_reduction <add>, %296, %cst_137 [1] : vector<16x128xf32> to vector<16xf32>
    %302 = vector.shape_cast %301 : vector<16xf32> to vector<16x1xf32>
    %cst_138 = arith.constant 3.125000e-02 : f32
    %303 = vector.broadcast %cst_138 : f32 to vector<16x1xf32>
    %304 = arith.mulf %302, %303 : vector<16x1xf32>
    %305 = vector.broadcast %304 : vector<16x1xf32> to vector<16x128xf32>
    %306 = arith.subf %296, %305 : vector<16x128xf32>
    %307 = vector.broadcast %4 : vector<1x128xf32> to vector<16x128xf32>
    %308 = arith.mulf %306, %307 : vector<16x128xf32>
    %309 = arith.mulf %308, %308 : vector<16x128xf32>
    %cst_139 = arith.constant dense<0.000000e+00> : vector<16xf32>
    %310 = vector.multi_reduction <add>, %309, %cst_139 [1] : vector<16x128xf32> to vector<16xf32>
    %311 = vector.shape_cast %310 : vector<16xf32> to vector<16x1xf32>
    %cst_140 = arith.constant 3.125000e-02 : f32
    %312 = vector.broadcast %cst_140 : f32 to vector<16x1xf32>
    %313 = arith.mulf %311, %312 : vector<16x1xf32>
    %cst_141 = arith.constant 9.99999996E-13 : f32
    %314 = vector.broadcast %cst_141 : f32 to vector<16x1xf32>
    %315 = arith.addf %313, %314 : vector<16x1xf32>
    %316 = math.rsqrt %315 : vector<16x1xf32>
    %317 = vector.broadcast %316 : vector<16x1xf32> to vector<16x128xf32>
    %318 = arith.mulf %308, %317 : vector<16x128xf32>
    %319 = vector.broadcast %298 : vector<1x128xf32> to vector<16x128xf32>
    %320 = arith.mulf %318, %319 : vector<16x128xf32>
    %321 = vector.broadcast %300 : vector<1x128xf32> to vector<16x128xf32>
    %322 = arith.addf %320, %321 : vector<16x128xf32>
    %c0_142 = arith.constant 0 : index
    %c0_143 = arith.constant 0 : index
    %323 = vector.load %arg16[%c0_142, %c0_143] : memref<128x128xf32, #tpu.memory_space<vmem>>, vector<128x128xf32>
    %cst_144 = arith.constant dense<0.000000e+00> : vector<16x128xf32>
    %324 = tpu.matmul %322, %323, %cst_144 {dimension_numbers = #tpu.dot_dimension_numbers<[1], [0], [0], [1], [0, 0, 1, 1], [], []>} : vector<16x128xf32>, vector<128x128xf32>, vector<16x128xf32> -> vector<16x128xf32>
    %c0_145 = arith.constant 0 : index
    %c0_146 = arith.constant 0 : index
    %325 = vector.load %arg17[%c0_145, %c0_146] : memref<1x128xf32, #tpu.memory_space<vmem>>, vector<1x128xf32>
    %326 = vector.broadcast %325 : vector<1x128xf32> to vector<16x128xf32>
    %327 = arith.addf %324, %326 : vector<16x128xf32>
    %c0_147 = arith.constant 0 : index
    %c0_148 = arith.constant 0 : index
    %328 = vector.load %arg18[%c0_147, %c0_148] : memref<16x128xf32, #tpu.memory_space<vmem>>, vector<16x128xf32>
    tpu.vector_store %arg18[%c0_147, %c0_148], %327 {strides = array<i32>} : memref<16x128xf32, #tpu.memory_space<vmem>>, vector<16x128xf32>,
    return
  }
}

</mosaic_0001>

<llo_original>
// kernel: forward.1
$region0: #{forward.1}
  #allocation0 [shape = 'u32[]', space=smem, size = 0x4, offset = 0x4, fixed_abs, tag = 'smem constant byte address 0x4 - core index']
  #allocation1 [shape = 'u32[144,128]{1,0:T(1,128)}', space=vmem, size = 0x12000, scoped, tag = 'internal scratch']
  %s0 = inlined_call_operand.vmem [shape: f32[16,128], index: 0, kind: input, shape index: {}]
  %s1 = inlined_call_operand.vmem [shape: f32[16,16], index: 1, kind: input, shape index: {}]
  %s2 = inlined_call_operand.vmem [shape: f32[1,128], index: 2, kind: input, shape index: {}]
  %s3 = inlined_call_operand.vmem [shape: f32[1,128], index: 3, kind: input, shape index: {}]
  %s4 = inlined_call_operand.hbm [shape: f32[2,128,384], index: 4, kind: input, shape index: {}]
  %s5 = inlined_call_operand.vmem [shape: f32[2,1,384], index: 5, kind: input, shape index: {}]
  %s6 = inlined_call_operand.vmem [shape: f32[2,128,128], index: 6, kind: input, shape index: {}]
  %s7 = inlined_call_operand.vmem [shape: f32[2,1,128], index: 7, kind: input, shape index: {}]
  %s8 = inlined_call_operand.vmem [shape: f32[2,1,128], index: 8, kind: input, shape index: {}]
  %s9 = inlined_call_operand.vmem [shape: f32[2,1,128], index: 9, kind: input, shape index: {}]
  %s10 = inlined_call_operand.hbm [shape: f32[2,128,128], index: 10, kind: input, shape index: {}]
  %s11 = inlined_call_operand.vmem [shape: f32[2,1,128], index: 11, kind: input, shape index: {}]
  %s12 = inlined_call_operand.hbm [shape: f32[2,128,128], index: 12, kind: input, shape index: {}]
  %s13 = inlined_call_operand.vmem [shape: f32[2,1,128], index: 13, kind: input, shape index: {}]
  %s14 = inlined_call_operand.vmem [shape: f32[2,1,128], index: 14, kind: input, shape index: {}]
  %s15 = inlined_call_operand.vmem [shape: f32[2,1,128], index: 15, kind: input, shape index: {}]
  %s16 = inlined_call_operand.hbm [shape: f32[128,128], index: 16, kind: input, shape index: {}]
  %s17 = inlined_call_operand.vmem [shape: f32[1,128], index: 17, kind: input, shape index: {}]
  %s18 = inlined_call_operand.vmem [shape: f32[16,128], index: 18, kind: output, shape index: {}]
  %s19 = sld [smem:[#allocation0]]
  $region98: #{forward.1} parent=0
    _
  %s21 = ssub.s32 1, %s19
  %s22 = scalar_select 0, %s21, %s19
  $region1: #{forward.1} parent=0
    #allocation2 [shape = 'u8[393216]{0}', space=vmem, size = 0x60000, scoped, tag = 'input window, operand 4, single buffered']
    #allocation3 [shape = 's32[1]{0}', space=sflag, size = 0x4, scoped, tag = 'scoped memory for forward.1']
    #allocation4 [shape = 'u8[131072]{0}', space=vmem, size = 0x20000, scoped, tag = 'input window, operand 10, single buffered']
    #allocation5 [shape = 's32[1]{0}', space=sflag, size = 0x4, scoped, tag = 'scoped memory for forward.1']
    #allocation6 [shape = 'u8[131072]{0}', space=vmem, size = 0x20000, scoped, tag = 'input window, operand 12, single buffered']
    #allocation7 [shape = 'u8[65536]{0}', space=vmem, size = 0x10000, scoped, tag = 'input window, operand 16, single buffered']
    #allocation8 [shape = 's32[1]{0}', space=sflag, size = 0x4, scoped, tag = 'scoped memory for forward.1']
    %23 = vsyncpa [#allocation3], 0
    %24 = vsyncpa [#allocation5], 0
    %25 = vsyncpa [#allocation8], 0
    // Predicated region
    $region2: #{forward.1} parent=1 // pred_check
      _
    $region3: #{forward.1} parent=1 // pred_check_branch
      %27 = sbr.rel (0) target = $region5
    $region4: #{forward.1} parent=1 // pred_region
      _
    $region5: #{forward.1} parent=1 // pred_fallthru
      _
    // Predicated region
    $region6: #{forward.1} parent=1 // pred_check
      _
    $region7: #{forward.1} parent=1 // pred_check_branch
      %29 = sbr.rel (0) target = $region9
    $region8: #{forward.1} parent=1 // pred_region
      _
    $region9: #{forward.1} parent=1 // pred_fallthru
      _
    // Predicated region
    $region10: #{forward.1} parent=1 // pred_check
      _
    $region11: #{forward.1} parent=1 // pred_check_branch
      %31 = sbr.rel (0) target = $region13
    $region12: #{forward.1} parent=1 // pred_region
      _
    $region13: #{forward.1} parent=1 // pred_fallthru
      _
    // Predicated region
    $region14: #{forward.1} parent=1 // pred_check
      _
    $region15: #{forward.1} parent=1 // pred_check_branch
      %33 = sbr.rel (0) target = $region17
    $region16: #{forward.1} parent=1 // pred_region
      _
    $region17: #{forward.1} parent=1 // pred_fallthru
      _
    // Predicated region
    $region18: #{forward.1} parent=1 // pred_check
      _
    $region19: #{forward.1} parent=1 // pred_check_branch
      %35 = sbr.rel (0) target = $region21
    $region20: #{forward.1} parent=1 // pred_region
      %s37 = ssub.s32 12288, 12288
      %38 = vsyncadd [#allocation3], %s37
      %s39 = sshll.u32 [#allocation2], 4
      %s40 = int_to_ptr.vmem [resolvable:$true] %s39
      %45 = dma.hbm_to_vmem [thread:$0]  %s4, 12288, %s40, [#allocation3], 384, 384, 24
    $region21: #{forward.1} parent=1 // pred_fallthru
      _
    // Predicated region
    $region22: #{forward.1} parent=1 // pred_check
      _
    $region23: #{forward.1} parent=1 // pred_check_branch
      %47 = sbr.rel (0) target = $region25
    $region24: #{forward.1} parent=1 // pred_region
      _
    $region25: #{forward.1} parent=1 // pred_fallthru
      _
    // Predicated region
    $region26: #{forward.1} parent=1 // pred_check
      _
    $region27: #{forward.1} parent=1 // pred_check_branch
      %49 = sbr.rel (0) target = $region29
    $region28: #{forward.1} parent=1 // pred_region
      _
    $region29: #{forward.1} parent=1 // pred_fallthru
      _
    // Predicated region
    $region30: #{forward.1} parent=1 // pred_check
      _
    $region31: #{forward.1} parent=1 // pred_check_branch
      %51 = sbr.rel (0) target = $region33
    $region32: #{forward.1} parent=1 // pred_region
      _
    $region33: #{forward.1} parent=1 // pred_fallthru
      _
    // Predicated region
    $region34: #{forward.1} parent=1 // pred_check
      _
    $region35: #{forward.1} parent=1 // pred_check_branch
      %53 = sbr.rel (0) target = $region37
    $region36: #{forward.1} parent=1 // pred_region
      _
    $region37: #{forward.1} parent=1 // pred_fallthru
      _
    // Predicated region
    $region38: #{forward.1} parent=1 // pred_check
      _
    $region39: #{forward.1} parent=1 // pred_check_branch
      %55 = sbr.rel (0) target = $region41
    $region40: #{forward.1} parent=1 // pred_region
      _
    $region41: #{forward.1} parent=1 // pred_fallthru
      _
    // Predicated region
    $region42: #{forward.1} parent=1 // pred_check
      _
    $region43: #{forward.1} parent=1 // pred_check_branch
      %57 = sbr.rel (0) target = $region45
    $region44: #{forward.1} parent=1 // pred_region
      %s59 = ssub.s32 4096, 4096
      %60 = vsyncadd [#allocation5], %s59
      %s61 = sshll.u32 [#allocation4], 4
      %s62 = int_to_ptr.vmem [resolvable:$true] %s61
      %67 = dma.hbm_to_vmem [thread:$0]  %s10, 4096, %s62, [#allocation5], 128, 128, 8
    $region45: #{forward.1} parent=1 // pred_fallthru
      _
    // Predicated region
    $region46: #{forward.1} parent=1 // pred_check
      _
    $region47: #{forward.1} parent=1 // pred_check_branch
      %69 = sbr.rel (0) target = $region49
    $region48: #{forward.1} parent=1 // pred_region
      _
    $region49: #{forward.1} parent=1 // pred_fallthru
      _
    // Predicated region
    $region50: #{forward.1} parent=1 // pred_check
      _
    $region51: #{forward.1} parent=1 // pred_check_branch
      %71 = sbr.rel (0) target = $region53
    $region52: #{forward.1} parent=1 // pred_region
      %s73 = ssub.s32 4096, 4096
      %74 = vsyncadd [#allocation5], %s73
      %s75 = sshll.u32 [#allocation6], 4
      %s76 = int_to_ptr.vmem [resolvable:$true] %s75
      %81 = dma.hbm_to_vmem [thread:$0]  %s12, 4096, %s76, [#allocation5], 128, 128, 8
    $region53: #{forward.1} parent=1 // pred_fallthru
      _
    // Predicated region
    $region54: #{forward.1} parent=1 // pred_check
      _
    $region55: #{forward.1} parent=1 // pred_check_branch
      %83 = sbr.rel (0) target = $region57
    $region56: #{forward.1} parent=1 // pred_region
      _
    $region57: #{forward.1} parent=1 // pred_fallthru
      _
    // Predicated region
    $region58: #{forward.1} parent=1 // pred_check
      _
    $region59: #{forward.1} parent=1 // pred_check_branch
      %85 = sbr.rel (0) target = $region61
    $region60: #{forward.1} parent=1 // pred_region
      _
    $region61: #{forward.1} parent=1 // pred_fallthru
      _
    // Predicated region
    $region62: #{forward.1} parent=1 // pred_check
      _
    $region63: #{forward.1} parent=1 // pred_check_branch
      %87 = sbr.rel (0) target = $region65
    $region64: #{forward.1} parent=1 // pred_region
      _
    $region65: #{forward.1} parent=1 // pred_fallthru
      _
    // Predicated region
    $region66: #{forward.1} parent=1 // pred_check
      _
    $region67: #{forward.1} parent=1 // pred_check_branch
      %89 = sbr.rel (0) target = $region69
    $region68: #{forward.1} parent=1 // pred_region
      %s91 = ssub.s32 2048, 2048
      %92 = vsyncadd [#allocation8], %s91
      %s93 = sshll.u32 [#allocation7], 4
      %s94 = int_to_ptr.vmem [resolvable:$true] %s93
      %99 = dma.hbm_to_vmem [thread:$0]  %s16, 2048, %s94, [#allocation8], 128, 128, 8
    $region69: #{forward.1} parent=1 // pred_fallthru
      _
    // Predicated region
    $region70: #{forward.1} parent=1 // pred_check
      _
    $region71: #{forward.1} parent=1 // pred_check_branch
      %101 = sbr.rel (0) target = $region73
    $region72: #{forward.1} parent=1 // pred_region
      _
    $region73: #{forward.1} parent=1 // pred_fallthru
      _
    // Predicated region
    $region74: #{forward.1} parent=1 // pred_check
      _
    $region75: #{forward.1} parent=1 // pred_check_branch
      %103 = sbr.rel (0) target = $region77
    $region76: #{forward.1} parent=1 // pred_region
      %104 = dma.done [#allocation3], 12288
    $region77: #{forward.1} parent=1 // pred_fallthru
      _
    // Predicated region
    $region78: #{forward.1} parent=1 // pred_check
      _
    $region79: #{forward.1} parent=1 // pred_check_branch
      %106 = sbr.rel (0) target = $region81
    $region80: #{forward.1} parent=1 // pred_region
      %107 = dma.done [#allocation5], 4096
    $region81: #{forward.1} parent=1 // pred_fallthru
      _
    // Predicated region
    $region82: #{forward.1} parent=1 // pred_check
      _
    $region83: #{forward.1} parent=1 // pred_check_branch
      %109 = sbr.rel (0) target = $region85
    $region84: #{forward.1} parent=1 // pred_region
      %110 = dma.done [#allocation5], 4096
    $region85: #{forward.1} parent=1 // pred_fallthru
      _
    // Predicated region
    $region86: #{forward.1} parent=1 // pred_check
      _
    $region87: #{forward.1} parent=1 // pred_check_branch
      %112 = sbr.rel (0) target = $region89
    $region88: #{forward.1} parent=1 // pred_region
      %113 = dma.done [#allocation8], 2048
    $region89: #{forward.1} parent=1 // pred_fallthru
      _
    %v114 = vlaneseq
    %v115 = vand.u32 %v114, 127
    %vm116 = vcmp.lt.s32.totalorder %v115, 32
    %v117 = vsel %vm116, 1, 0
    %v118 = vcvt.s32.f32 %v117
    %vm119 = vcmp.ge.s32.totalorder %v115, 0
    %vm120 = vcmp.lt.s32.totalorder %v115, 16
    %vm121 = vmand %vm119, %vm120
    %v122 = vsel %vm121, 1, 0
    %v123 = vcvt.s32.f32 %v122
    %vm124 = vcmp.ge.s32.totalorder %v115, 16
    %vm125 = vmand %vm124, %vm116
    %v126 = vsel %vm125, 1, 0
    %v127 = vcvt.s32.f32 %v126
    %v128 = vld [vmem:[%s1] sm:$0xff]
    %v129 = vld [vmem:[%s1 + $0x8] sm:$0xff]
    %v130 = vld [vmem:[%s0] sm:$0xff]
    %v131 = vld [vmem:[%s0 + $0x8] sm:$0xff]
    %v132 = vld [vmem:[%s2] sm:$0x1]
    %v133 = vld [vmem:[%s3] sm:$0x1]
    %134 = vadd.xlane.f32.xlu0 %v130
    %v135 = vpop.xlane.xlu0 %134
    %136 = vadd.xlane.f32.xlu0 %v131
    %v137 = vpop.xlane.xlu0 %136
    %v138 = vmul.f32 %v135, 0.03125
    %v139 = vmul.f32 %v137, 0.03125
    %v140 = vsub.f32 %v130, %v138
    %v141 = vsub.f32 %v131, %v139
    %v142 = vmul.f32 %v140, %v118
    %v143 = vmul.f32 %v141, %v118
    %v144 = vmul.f32 %v142, %v142
    %v145 = vmul.f32 %v143, %v143
    %146 = vadd.xlane.f32.xlu0 %v144
    %v147 = vpop.xlane.xlu0 %146
    %148 = vadd.xlane.f32.xlu0 %v145
    %v149 = vpop.xlane.xlu0 %148
    %v150 = vmul.f32 %v147, 0.03125
    %v151 = vmul.f32 %v149, 0.03125
    %v152 = vadd.f32 %v150, 1e-12
    %v153 = vadd.f32 %v151, 1e-12
    %v154 = vrsqrt.pop %v152
    %v155 = vrsqrt.pop %v153
    %v156 = vmul.f32 %v142, %v154
    %v157 = vmul.f32 %v143, %v155
    %v159 = vlaneseq
    %v160 = vshrl.u32 %v159, 7
    %v161 = vsub.s32 0, %v160
    %v162 = vrot.slane %v132, %v161
    %v164 = vmul.f32 %v156, %v162
    %v165 = vmul.f32 %v157, %v162
    %v167 = vlaneseq
    %v168 = vshrl.u32 %v167, 7
    %v169 = vsub.s32 0, %v168
    %v170 = vrot.slane %v133, %v169
    %v172 = vadd.f32 %v164, %v170
    %v173 = vadd.f32 %v165, %v170
    %v174 = vld [vmem:[#allocation2] sm:$0xff]
    %v175 = vld [vmem:[#allocation2 + $0x8] sm:$0xff]
    %v176 = vld [vmem:[#allocation2 + $0x10] sm:$0xff]
    %v177 = vld [vmem:[#allocation2 + $0x18] sm:$0xff]
    %v178 = vld [vmem:[#allocation2 + $0x20] sm:$0xff]
    %v179 = vld [vmem:[#allocation2 + $0x28] sm:$0xff]
    %v180 = vld [vmem:[#allocation2 + $0x30] sm:$0xff]
    %v181 = vld [vmem:[#allocation2 + $0x38] sm:$0xff]
    %v182 = vld [vmem:[#allocation2 + $0x40] sm:$0xff]
    %v183 = vld [vmem:[#allocation2 + $0x48] sm:$0xff]
    %v184 = vld [vmem:[#allocation2 + $0x50] sm:$0xff]
    %v185 = vld [vmem:[#allocation2 + $0x58] sm:$0xff]
    %v186 = vld [vmem:[#allocation2 + $0x60] sm:$0xff]
    %v187 = vld [vmem:[#allocation2 + $0x68] sm:$0xff]
    %v188 = vld [vmem:[#allocation2 + $0x70] sm:$0xff]
    %v189 = vld [vmem:[#allocation2 + $0x78] sm:$0xff]
    %v190 = vld [vmem:[#allocation2 + $0x80] sm:$0xff]
    %v191 = vld [vmem:[#allocation2 + $0x88] sm:$0xff]
    %v192 = vld [vmem:[#allocation2 + $0x90] sm:$0xff]
    %v193 = vld [vmem:[#allocation2 + $0x98] sm:$0xff]
    %v194 = vld [vmem:[#allocation2 + $0xa0] sm:$0xff]
    %v195 = vld [vmem:[#allocation2 + $0xa8] sm:$0xff]
    %v196 = vld [vmem:[#allocation2 + $0xb0] sm:$0xff]
    %v197 = vld [vmem:[#allocation2 + $0xb8] sm:$0xff]
    %v198 = vld [vmem:[#allocation2 + $0xc0] sm:$0xff]
    %v199 = vld [vmem:[#allocation2 + $0xc8] sm:$0xff]
    %v200 = vld [vmem:[#allocation2 + $0xd0] sm:$0xff]
    %v201 = vld [vmem:[#allocation2 + $0xd8] sm:$0xff]
    %v202 = vld [vmem:[#allocation2 + $0xe0] sm:$0xff]
    %v203 = vld [vmem:[#allocation2 + $0xe8] sm:$0xff]
    %v204 = vld [vmem:[#allocation2 + $0xf0] sm:$0xff]
    %v205 = vld [vmem:[#allocation2 + $0xf8] sm:$0xff]
    %v206 = vld [vmem:[#allocation2 + $0x100] sm:$0xff]
    %v207 = vld [vmem:[#allocation2 + $0x108] sm:$0xff]
    %v208 = vld [vmem:[#allocation2 + $0x110] sm:$0xff]
    %v209 = vld [vmem:[#allocation2 + $0x118] sm:$0xff]
    %v210 = vld [vmem:[#allocation2 + $0x120] sm:$0xff]
    %v211 = vld [vmem:[#allocation2 + $0x128] sm:$0xff]
    %v212 = vld [vmem:[#allocation2 + $0x130] sm:$0xff]
    %v213 = vld [vmem:[#allocation2 + $0x138] sm:$0xff]
    %v214 = vld [vmem:[#allocation2 + $0x140] sm:$0xff]
    %v215 = vld [vmem:[#allocation2 + $0x148] sm:$0xff]
    %v216 = vld [vmem:[#allocation2 + $0x150] sm:$0xff]
    %v217 = vld [vmem:[#allocation2 + $0x158] sm:$0xff]
    %v218 = vld [vmem:[#allocation2 + $0x160] sm:$0xff]
    %v219 = vld [vmem:[#allocation2 + $0x168] sm:$0xff]
    %v220 = vld [vmem:[#allocation2 + $0x170] sm:$0xff]
    %v221 = vld [vmem:[#allocation2 + $0x178] sm:$0xff]
    %v222 = vld [vmem:[%s5] sm:$0x7]
    %v224 = vlaneseq
    %v225 = vshrl.u32 %v224, 7
    %v226 = vsub.s32 0, %v225
    %v227 = vrot.slane %v222, %v226
    %v228 = vlaneseq
    %v229 = vshrl.u32 %v228, 7
    %v230 = vsub.s32 1, %v229
    %v231 = vrot.slane %v222, %v230
    %v232 = vlaneseq
    %v233 = vshrl.u32 %v232, 7
    %v234 = vsub.s32 2, %v233
    %v235 = vrot.slane %v222, %v234
    %239 = vmatprep.subr.mxu0 %v175
    %240 = vmatpush1.msra.mxu0 %v174
    %241 = vmatprep.subr.mxu0 %v178
    %242 = vmatpush1.msra.mxu0 %v177
    %243 = vmatprep.subr.mxu0 %v181
    %244 = vmatpush1.msra.mxu0 %v180
    %245 = vmatprep.subr.mxu0 %v184
    %246 = vmatpush1.msra.mxu0 %v183
    %247 = vmatprep.subr.mxu0 %v187
    %248 = vmatpush1.msra.mxu0 %v186
    %249 = vmatprep.subr.mxu0 %v190
    %250 = vmatpush1.msra.mxu0 %v189
    %251 = vmatprep.subr.mxu0 %v193
    %252 = vmatpush1.msra.mxu0 %v192
    %253 = vmatprep.subr.mxu0 %v196
    %254 = vmatpush1.msra.mxu0 %v195
    %255 = vmatprep.subr.mxu0 %v199
    %256 = vmatpush1.msra.mxu0 %v198
    %257 = vmatprep.subr.mxu0 %v202
    %258 = vmatpush1.msra.mxu0 %v201
    %259 = vmatprep.subr.mxu0 %v205
    %260 = vmatpush1.msra.mxu0 %v204
    %261 = vmatprep.subr.mxu0 %v208
    %262 = vmatpush1.msra.mxu0 %v207
    %263 = vmatprep.subr.mxu0 %v211
    %264 = vmatpush1.msra.mxu0 %v210
    %265 = vmatprep.subr.mxu0 %v214
    %266 = vmatpush1.msra.mxu0 %v213
    %267 = vmatprep.subr.mxu0 %v217
    %268 = vmatpush1.msra.mxu0 %v216
    %269 = vmatprep.subr.mxu0 %v220
    %270 = vmatpush1.msra.mxu0 %v219
    %271 = vmatprep.subr.mxu0 0.0
    %272 = vmatpush1.msra.mxu0 0.0
    %273 = vmatprep.subr.mxu0 0.0
    %274 = vmatpush1.msra.mxu0 0.0
    %275 = vmatprep.subr.mxu0 0.0
    %276 = vmatpush1.msra.mxu0 0.0
    %277 = vmatprep.subr.mxu0 0.0
    %278 = vmatpush1.msra.mxu0 0.0
    %279 = vmatprep.subr.mxu0 0.0
    %280 = vmatpush1.msra.mxu0 0.0
    %281 = vmatprep.subr.mxu0 0.0
    %282 = vmatpush1.msra.mxu0 0.0
    %283 = vmatprep.subr.mxu0 0.0
    %284 = vmatpush1.msra.mxu0 0.0
    %285 = vmatprep.subr.mxu0 0.0
    %286 = vmatpush1.msra.mxu0 0.0
    %287 = vmatprep.subr.mxu0 0.0
    %288 = vmatpush1.msra.mxu0 0.0
    %289 = vmatprep.subr.mxu0 0.0
    %290 = vmatpush1.msra.mxu0 0.0
    %291 = vmatprep.subr.mxu0 0.0
    %292 = vmatpush1.msra.mxu0 0.0
    %293 = vmatprep.subr.mxu0 0.0
    %294 = vmatpush1.msra.mxu0 0.0
    %295 = vmatprep.subr.mxu0 0.0
    %296 = vmatpush1.msra.mxu0 0.0
    %297 = vmatprep.subr.mxu0 0.0
    %298 = vmatpush1.msra.mxu0 0.0
    %299 = vmatprep.subr.mxu0 0.0
    %300 = vmatpush1.msra.mxu0 0.0
    %301 = vmatprep.subr.mxu0 0.0
    %302 = vmatpush1.msra.mxu0 0.0
    %303 = vmatprep.mubr.f32.mxu0 0.0
    %304 = vmatmul.mubr.f32.gmra.mrb[0].mxu0 %v172
    %v305 = vpop.f32.mrb[0].mxu0
    %v306 = vadd.f32 %v227, %v305
    %v307 = vpop.f32.mrb[0].mxu0
    %v308 = vadd.f32 %v231, %v307
    %309 = vmatprep.mubr.f32.mxu0 0.0
    %310 = vmatmul.mubr.f32.gmra.mrb[0].mxu0 %v173
    %v311 = vpop.f32.mrb[0].mxu0
    %v312 = vadd.f32 %v227, %v311
    %v313 = vpop.f32.mrb[0].mxu0
    %v314 = vadd.f32 %v231, %v313
    %315 = vdwg.mxu0
    %316 = vmatprep.subr.mxu0 0.0
    %317 = vmatpush1.msra.mxu0 %v176
    %318 = vmatprep.subr.mxu0 0.0
    %319 = vmatpush1.msra.mxu0 %v179
    %320 = vmatprep.subr.mxu0 0.0
    %321 = vmatpush1.msra.mxu0 %v182
    %322 = vmatprep.subr.mxu0 0.0
    %323 = vmatpush1.msra.mxu0 %v185
    %324 = vmatprep.subr.mxu0 0.0
    %325 = vmatpush1.msra.mxu0 %v188
    %326 = vmatprep.subr.mxu0 0.0
    %327 = vmatpush1.msra.mxu0 %v191
    %328 = vmatprep.subr.mxu0 0.0
    %329 = vmatpush1.msra.mxu0 %v194
    %330 = vmatprep.subr.mxu0 0.0
    %331 = vmatpush1.msra.mxu0 %v197
    %332 = vmatprep.subr.mxu0 0.0
    %333 = vmatpush1.msra.mxu0 %v200
    %334 = vmatprep.subr.mxu0 0.0
    %335 = vmatpush1.msra.mxu0 %v203
    %336 = vmatprep.subr.mxu0 0.0
    %337 = vmatpush1.msra.mxu0 %v206
    %338 = vmatprep.subr.mxu0 0.0
    %339 = vmatpush1.msra.mxu0 %v209
    %340 = vmatprep.subr.mxu0 0.0
    %341 = vmatpush1.msra.mxu0 %v212
    %342 = vmatprep.subr.mxu0 0.0
    %343 = vmatpush1.msra.mxu0 %v215
    %344 = vmatprep.subr.mxu0 0.0
    %345 = vmatpush1.msra.mxu0 %v218
    %346 = vmatprep.subr.mxu0 0.0
    %347 = vmatpush1.msra.mxu0 %v221
    %348 = vmatprep.subr.mxu0 0.0
    %349 = vmatpush1.msra.mxu0 0.0
    %350 = vmatprep.subr.mxu0 0.0
    %351 = vmatpush1.msra.mxu0 0.0
    %352 = vmatprep.subr.mxu0 0.0
    %353 = vmatpush1.msra.mxu0 0.0
    %354 = vmatprep.subr.mxu0 0.0
    %355 = vmatpush1.msra.mxu0 0.0
    %356 = vmatprep.subr.mxu0 0.0
    %357 = vmatpush1.msra.mxu0 0.0
    %358 = vmatprep.subr.mxu0 0.0
    %359 = vmatpush1.msra.mxu0 0.0
    %360 = vmatprep.subr.mxu0 0.0
    %361 = vmatpush1.msra.mxu0 0.0
    %362 = vmatprep.subr.mxu0 0.0
    %363 = vmatpush1.msra.mxu0 0.0
    %364 = vmatprep.subr.mxu0 0.0
    %365 = vmatpush1.msra.mxu0 0.0
    %366 = vmatprep.subr.mxu0 0.0
    %367 = vmatpush1.msra.mxu0 0.0
    %368 = vmatprep.subr.mxu0 0.0
    %369 = vmatpush1.msra.mxu0 0.0
    %370 = vmatprep.subr.mxu0 0.0
    %371 = vmatpush1.msra.mxu0 0.0
    %372 = vmatprep.subr.mxu0 0.0
    %373 = vmatpush1.msra.mxu0 0.0
    %374 = vmatprep.subr.mxu0 0.0
    %375 = vmatpush1.msra.mxu0 0.0
    %376 = vmatprep.subr.mxu0 0.0
    %377 = vmatpush1.msra.mxu0 0.0
    %378 = vmatprep.subr.mxu0 0.0
    %379 = vmatpush1.msra.mxu0 0.0
    %380 = vmatprep.mubr.f32.mxu0 0.0
    %381 = vmatmul.mubr.f32.gmra.mrb[0].mxu0 %v172
    %v382 = vpop.f32.mrb[0].mxu0
    %v383 = vadd.f32 %v235, %v382
    %v384 = vpop.f32.mrb[0].mxu0
    %385 = vmatprep.mubr.f32.mxu0 0.0
    %386 = vmatmul.mubr.f32.gmra.mrb[0].mxu0 %v173
    %v387 = vpop.f32.mrb[0].mxu0
    %v388 = vadd.f32 %v235, %v387
    %v389 = vpop.f32.mrb[0].mxu0
    %390 = vdwg.mxu0
    %v391 = vmul.f32 %v306, %v123
    %v392 = vmul.f32 %v312, %v123
    %393 = vmatprep.subr.mxu0 0.0
    %394 = vmatpush1.xpose.msra.mxu0 %v308
    %395 = vmatprep.subr.mxu0 0.0
    %396 = vmatpush1.xpose.msra.mxu0 %v314
    %397 = vmatprep.subr.mxu0 0.0
    %398 = vmatpush1.xpose.msra.mxu0 0.0
    %399 = vmatprep.subr.mxu0 0.0
    %400 = vmatpush1.xpose.msra.mxu0 0.0
    %401 = vmatprep.subr.mxu0 0.0
    %402 = vmatpush1.xpose.msra.mxu0 0.0
    %403 = vmatprep.subr.mxu0 0.0
    %404 = vmatpush1.xpose.msra.mxu0 0.0
    %405 = vmatprep.subr.mxu0 0.0
    %406 = vmatpush1.xpose.msra.mxu0 0.0
    %407 = vmatprep.subr.mxu0 0.0
    %408 = vmatpush1.xpose.msra.mxu0 0.0
    %409 = vmatprep.subr.mxu0 0.0
    %410 = vmatpush1.xpose.msra.mxu0 0.0
    %411 = vmatprep.subr.mxu0 0.0
    %412 = vmatpush1.xpose.msra.mxu0 0.0
    %413 = vmatprep.subr.mxu0 0.0
    %414 = vmatpush1.xpose.msra.mxu0 0.0
    %415 = vmatprep.subr.mxu0 0.0
    %416 = vmatpush1.xpose.msra.mxu0 0.0
    %417 = vmatprep.subr.mxu0 0.0
    %418 = vmatpush1.xpose.msra.mxu0 0.0
    %419 = vmatprep.subr.mxu0 0.0
    %420 = vmatpush1.xpose.msra.mxu0 0.0
    %421 = vmatprep.subr.mxu0 0.0
    %422 = vmatpush1.xpose.msra.mxu0 0.0
    %423 = vmatprep.subr.mxu0 0.0
    %424 = vmatpush1.xpose.msra.mxu0 0.0
    %425 = vmatprep.subr.mxu0 0.0
    %426 = vmatpush1.xpose.msra.mxu0 0.0
    %427 = vmatprep.subr.mxu0 0.0
    %428 = vmatpush1.xpose.msra.mxu0 0.0
    %429 = vmatprep.subr.mxu0 0.0
    %430 = vmatpush1.xpose.msra.mxu0 0.0
    %431 = vmatprep.subr.mxu0 0.0
    %432 = vmatpush1.xpose.msra.mxu0 0.0
    %433 = vmatprep.subr.mxu0 0.0
    %434 = vmatpush1.xpose.msra.mxu0 0.0
    %435 = vmatprep.subr.mxu0 0.0
    %436 = vmatpush1.xpose.msra.mxu0 0.0
    %437 = vmatprep.subr.mxu0 0.0
    %438 = vmatpush1.xpose.msra.mxu0 0.0
    %439 = vmatprep.subr.mxu0 0.0
    %440 = vmatpush1.xpose.msra.mxu0 0.0
    %441 = vmatprep.subr.mxu0 0.0
    %442 = vmatpush1.xpose.msra.mxu0 0.0
    %443 = vmatprep.subr.mxu0 0.0
    %444 = vmatpush1.xpose.msra.mxu0 0.0
    %445 = vmatprep.subr.mxu0 0.0
    %446 = vmatpush1.xpose.msra.mxu0 0.0
    %447 = vmatprep.subr.mxu0 0.0
    %448 = vmatpush1.xpose.msra.mxu0 0.0
    %449 = vmatprep.subr.mxu0 0.0
    %450 = vmatpush1.xpose.msra.mxu0 0.0
    %451 = vmatprep.subr.mxu0 0.0
    %452 = vmatpush1.xpose.msra.mxu0 0.0
    %453 = vmatprep.subr.mxu0 0.0
    %454 = vmatpush1.xpose.msra.mxu0 0.0
    %455 = vmatprep.subr.mxu0 0.0
    %456 = vmatpush1.xpose.msra.mxu0 0.0
    %457 = vmatprep.mubr.f32.mxu0 0.0
    %458 = vmatmul.mubr.f32.gmra.mrb[0].mxu0 %v391
    %v459 = vpop.f32.mrb[0].mxu0
    %v460 = vadd.f32 0.0, %v459
    %v461 = vpop.f32.mrb[0].mxu0
    %462 = vmatprep.mubr.f32.mxu0 0.0
    %463 = vmatmul.mubr.f32.gmra.mrb[0].mxu0 %v392
    %v464 = vpop.f32.mrb[0].mxu0
    %v465 = vadd.f32 0.0, %v464
    %v466 = vpop.f32.mrb[0].mxu0
    %467 = vdwg.mxu0
    %v468 = vmul.f32 %v460, 0.25
    %v469 = vmul.f32 %v465, 0.25
    %v470 = vadd.f32 %v468, %v128
    %v471 = vadd.f32 %v469, %v129
    %vm472 = vcmask 130048
    %v473 = vsel %vm472, %v470, -inf
    %474 = vmax.xlane.f32.xlu0 %v473
    %v475 = vpop.xlane.xlu0 %474
    %v476 = vsel %vm472, %v471, -inf
    %477 = vmax.xlane.f32.xlu0 %v476
    %v478 = vpop.xlane.xlu0 %477
    %v479 = vsub.f32 %v470, %v475
    %v480 = vsub.f32 %v471, %v478
    %v481 = vmul.f32 %v479, 1.442695
    %v482 = vpow.pop %v481
    %v483 = vmul.f32 %v480, 1.442695
    %v484 = vpow.pop %v483
    %v485 = vsel %vm472, %v482, 0.0
    %486 = vadd.xlane.f32.xlu0 %v485
    %v487 = vpop.xlane.xlu0 %486
    %v488 = vsel %vm472, %v484, 0.0
    %489 = vadd.xlane.f32.xlu0 %v488
    %v490 = vpop.xlane.xlu0 %489
    %v491 = vrcp.pop %v487
    %v492 = vrcp.pop %v490
    %v493 = vmul.f32 %v482, %v491
    %v494 = vmul.f32 %v484, %v492
    %v495 = vmul.f32 %v383, %v123
    %v496 = vmul.f32 %v388, %v123
    %v497 = vmul.f32 %v306, %v127
    %v498 = vmul.f32 %v312, %v127
    %499 = vmatprep.subr.mxu0 0.0
    %500 = vmatpush1.xpose.msra.mxu0 %v308
    %501 = vmatprep.subr.mxu0 0.0
    %502 = vmatpush1.xpose.msra.mxu0 %v314
    %503 = vmatprep.subr.mxu0 0.0
    %504 = vmatpush1.xpose.msra.mxu0 0.0
    %505 = vmatprep.subr.mxu0 0.0
    %506 = vmatpush1.xpose.msra.mxu0 0.0
    %507 = vmatprep.subr.mxu0 0.0
    %508 = vmatpush1.xpose.msra.mxu0 0.0
    %509 = vmatprep.subr.mxu0 0.0
    %510 = vmatpush1.xpose.msra.mxu0 0.0
    %511 = vmatprep.subr.mxu0 0.0
    %512 = vmatpush1.xpose.msra.mxu0 0.0
    %513 = vmatprep.subr.mxu0 0.0
    %514 = vmatpush1.xpose.msra.mxu0 0.0
    %515 = vmatprep.subr.mxu0 0.0
    %516 = vmatpush1.xpose.msra.mxu0 0.0
    %517 = vmatprep.subr.mxu0 0.0
    %518 = vmatpush1.xpose.msra.mxu0 0.0
    %519 = vmatprep.subr.mxu0 0.0
    %520 = vmatpush1.xpose.msra.mxu0 0.0
    %521 = vmatprep.subr.mxu0 0.0
    %522 = vmatpush1.xpose.msra.mxu0 0.0
    %523 = vmatprep.subr.mxu0 0.0
    %524 = vmatpush1.xpose.msra.mxu0 0.0
    %525 = vmatprep.subr.mxu0 0.0
    %526 = vmatpush1.xpose.msra.mxu0 0.0
    %527 = vmatprep.subr.mxu0 0.0
    %528 = vmatpush1.xpose.msra.mxu0 0.0
    %529 = vmatprep.subr.mxu0 0.0
    %530 = vmatpush1.xpose.msra.mxu0 0.0
    %531 = vmatprep.subr.mxu0 0.0
    %532 = vmatpush1.xpose.msra.mxu0 0.0
    %533 = vmatprep.subr.mxu0 0.0
    %534 = vmatpush1.xpose.msra.mxu0 0.0
    %535 = vmatprep.subr.mxu0 0.0
    %536 = vmatpush1.xpose.msra.mxu0 0.0
    %537 = vmatprep.subr.mxu0 0.0
    %538 = vmatpush1.xpose.msra.mxu0 0.0
    %539 = vmatprep.subr.mxu0 0.0
    %540 = vmatpush1.xpose.msra.mxu0 0.0
    %541 = vmatprep.subr.mxu0 0.0
    %542 = vmatpush1.xpose.msra.mxu0 0.0
    %543 = vmatprep.subr.mxu0 0.0
    %544 = vmatpush1.xpose.msra.mxu0 0.0
    %545 = vmatprep.subr.mxu0 0.0
    %546 = vmatpush1.xpose.msra.mxu0 0.0
    %547 = vmatprep.subr.mxu0 0.0
    %548 = vmatpush1.xpose.msra.mxu0 0.0
    %549 = vmatprep.subr.mxu0 0.0
    %550 = vmatpush1.xpose.msra.mxu0 0.0
    %551 = vmatprep.subr.mxu0 0.0
    %552 = vmatpush1.xpose.msra.mxu0 0.0
    %553 = vmatprep.subr.mxu0 0.0
    %554 = vmatpush1.xpose.msra.mxu0 0.0
    %555 = vmatprep.subr.mxu0 0.0
    %556 = vmatpush1.xpose.msra.mxu0 0.0
    %557 = vmatprep.subr.mxu0 0.0
    %558 = vmatpush1.xpose.msra.mxu0 0.0
    %559 = vmatprep.subr.mxu0 0.0
    %560 = vmatpush1.xpose.msra.mxu0 0.0
    %561 = vmatprep.subr.mxu0 0.0
    %562 = vmatpush1.xpose.msra.mxu0 0.0
    %563 = vmatprep.mubr.f32.mxu0 0.0
    %564 = vmatmul.mubr.f32.gmra.mrb[0].mxu0 %v497
    %v565 = vpop.f32.mrb[0].mxu0
    %v566 = vadd.f32 0.0, %v565
    %v567 = vpop.f32.mrb[0].mxu0
    %568 = vmatprep.mubr.f32.mxu0 0.0
    %569 = vmatmul.mubr.f32.gmra.mrb[0].mxu0 %v498
    %v570 = vpop.f32.mrb[0].mxu0
    %v571 = vadd.f32 0.0, %v570
    %v572 = vpop.f32.mrb[0].mxu0
    %573 = vdwg.mxu0
    %v574 = vmul.f32 %v566, 0.25
    %v575 = vmul.f32 %v571, 0.25
    %v576 = vadd.f32 %v574, %v128
    %v577 = vadd.f32 %v575, %v129
    %v578 = vsel %vm472, %v576, -inf
    %579 = vmax.xlane.f32.xlu0 %v578
    %v580 = vpop.xlane.xlu0 %579
    %v581 = vsel %vm472, %v577, -inf
    %582 = vmax.xlane.f32.xlu0 %v581
    %v583 = vpop.xlane.xlu0 %582
    %v584 = vsub.f32 %v576, %v580
    %v585 = vsub.f32 %v577, %v583
    %v586 = vmul.f32 %v584, 1.442695
    %v587 = vpow.pop %v586
    %v588 = vmul.f32 %v585, 1.442695
    %v589 = vpow.pop %v588
    %v590 = vsel %vm472, %v587, 0.0
    %591 = vadd.xlane.f32.xlu0 %v590
    %v592 = vpop.xlane.xlu0 %591
    %v593 = vsel %vm472, %v589, 0.0
    %594 = vadd.xlane.f32.xlu0 %v593
    %v595 = vpop.xlane.xlu0 %594
    %v596 = vrcp.pop %v592
    %v597 = vrcp.pop %v595
    %v598 = vmul.f32 %v587, %v596
    %v599 = vmul.f32 %v589, %v597
    %v600 = vmul.f32 %v383, %v127
    %v601 = vmul.f32 %v388, %v127
    %v603 = vsel %vm472, %v598, 0
    %v606 = vsel %vm472, %v599, 0
    %608 = vmatprep.subr.mxu0 0.0
    %609 = vmatpush1.msra.mxu0 %v600
    %610 = vmatprep.subr.mxu0 0.0
    %611 = vmatpush1.msra.mxu0 %v601
    %612 = vmatprep.subr.mxu0 0.0
    %613 = vmatpush1.msra.mxu0 0.0
    %614 = vmatprep.subr.mxu0 0.0
    %615 = vmatpush1.msra.mxu0 0.0
    %616 = vmatprep.subr.mxu0 0.0
    %617 = vmatpush1.msra.mxu0 0.0
    %618 = vmatprep.subr.mxu0 0.0
    %619 = vmatpush1.msra.mxu0 0.0
    %620 = vmatprep.subr.mxu0 0.0
    %621 = vmatpush1.msra.mxu0 0.0
    %622 = vmatprep.subr.mxu0 0.0
    %623 = vmatpush1.msra.mxu0 0.0
    %624 = vmatprep.subr.mxu0 0.0
    %625 = vmatpush1.msra.mxu0 0.0
    %626 = vmatprep.subr.mxu0 0.0
    %627 = vmatpush1.msra.mxu0 0.0
    %628 = vmatprep.subr.mxu0 0.0
    %629 = vmatpush1.msra.mxu0 0.0
    %630 = vmatprep.subr.mxu0 0.0
    %631 = vmatpush1.msra.mxu0 0.0
    %632 = vmatprep.subr.mxu0 0.0
    %633 = vmatpush1.msra.mxu0 0.0
    %634 = vmatprep.subr.mxu0 0.0
    %635 = vmatpush1.msra.mxu0 0.0
    %636 = vmatprep.subr.mxu0 0.0
    %637 = vmatpush1.msra.mxu0 0.0
    %638 = vmatprep.subr.mxu0 0.0
    %639 = vmatpush1.msra.mxu0 0.0
    %640 = vmatprep.subr.mxu0 0.0
    %641 = vmatpush1.msra.mxu0 0.0
    %642 = vmatprep.subr.mxu0 0.0
    %643 = vmatpush1.msra.mxu0 0.0
    %644 = vmatprep.subr.mxu0 0.0
    %645 = vmatpush1.msra.mxu0 0.0
    %646 = vmatprep.subr.mxu0 0.0
    %647 = vmatpush1.msra.mxu0 0.0
    %648 = vmatprep.subr.mxu0 0.0
    %649 = vmatpush1.msra.mxu0 0.0
    %650 = vmatprep.subr.mxu0 0.0
    %651 = vmatpush1.msra.mxu0 0.0
    %652 = vmatprep.subr.mxu0 0.0
    %653 = vmatpush1.msra.mxu0 0.0
    %654 = vmatprep.subr.mxu0 0.0
    %655 = vmatpush1.msra.mxu0 0.0
    %656 = vmatprep.subr.mxu0 0.0
    %657 = vmatpush1.msra.mxu0 0.0
    %658 = vmatprep.subr.mxu0 0.0
    %659 = vmatpush1.msra.mxu0 0.0
    %660 = vmatprep.subr.mxu0 0.0
    %661 = vmatpush1.msra.mxu0 0.0
    %662 = vmatprep.subr.mxu0 0.0
    %663 = vmatpush1.msra.mxu0 0.0
    %664 = vmatprep.subr.mxu0 0.0
    %665 = vmatpush1.msra.mxu0 0.0
    %666 = vmatprep.subr.mxu0 0.0
    %667 = vmatpush1.msra.mxu0 0.0
    %668 = vmatprep.subr.mxu0 0.0
    %669 = vmatpush1.msra.mxu0 0.0
    %670 = vmatprep.subr.mxu0 0.0
    %671 = vmatpush1.msra.mxu0 0.0
    %672 = vmatprep.mubr.f32.mxu0 0.0
    %673 = vmatmul.mubr.f32.gmra.mrb[0].mxu0 %v603
    %v674 = vpop.f32.mrb[0].mxu0
    %v675 = vadd.f32 0.0, %v674
    %v676 = vpop.f32.mrb[0].mxu0
    %677 = vmatprep.mubr.f32.mxu0 0.0
    %678 = vmatmul.mubr.f32.gmra.mrb[0].mxu0 %v606
    %v679 = vpop.f32.mrb[0].mxu0
    %v680 = vadd.f32 0.0, %v679
    %v681 = vpop.f32.mrb[0].mxu0
    %682 = vdwg.mxu0
    %v684 = vsel %vm472, %v493, 0
    %v687 = vsel %vm472, %v494, 0
    %689 = vmatprep.subr.mxu0 0.0
    %690 = vmatpush1.msra.mxu0 %v495
    %691 = vmatprep.subr.mxu0 0.0
    %692 = vmatpush1.msra.mxu0 %v496
    %693 = vmatprep.subr.mxu0 0.0
    %694 = vmatpush1.msra.mxu0 0.0
    %695 = vmatprep.subr.mxu0 0.0
    %696 = vmatpush1.msra.mxu0 0.0
    %697 = vmatprep.subr.mxu0 0.0
    %698 = vmatpush1.msra.mxu0 0.0
    %699 = vmatprep.subr.mxu0 0.0
    %700 = vmatpush1.msra.mxu0 0.0
    %701 = vmatprep.subr.mxu0 0.0
    %702 = vmatpush1.msra.mxu0 0.0
    %703 = vmatprep.subr.mxu0 0.0
    %704 = vmatpush1.msra.mxu0 0.0
    %705 = vmatprep.subr.mxu0 0.0
    %706 = vmatpush1.msra.mxu0 0.0
    %707 = vmatprep.subr.mxu0 0.0
    %708 = vmatpush1.msra.mxu0 0.0
    %709 = vmatprep.subr.mxu0 0.0
    %710 = vmatpush1.msra.mxu0 0.0
    %711 = vmatprep.subr.mxu0 0.0
    %712 = vmatpush1.msra.mxu0 0.0
    %713 = vmatprep.subr.mxu0 0.0
    %714 = vmatpush1.msra.mxu0 0.0
    %715 = vmatprep.subr.mxu0 0.0
    %716 = vmatpush1.msra.mxu0 0.0
    %717 = vmatprep.subr.mxu0 0.0
    %718 = vmatpush1.msra.mxu0 0.0
    %719 = vmatprep.subr.mxu0 0.0
    %720 = vmatpush1.msra.mxu0 0.0
    %721 = vmatprep.subr.mxu0 0.0
    %722 = vmatpush1.msra.mxu0 0.0
    %723 = vmatprep.subr.mxu0 0.0
    %724 = vmatpush1.msra.mxu0 0.0
    %725 = vmatprep.subr.mxu0 0.0
    %726 = vmatpush1.msra.mxu0 0.0
    %727 = vmatprep.subr.mxu0 0.0
    %728 = vmatpush1.msra.mxu0 0.0
    %729 = vmatprep.subr.mxu0 0.0
    %730 = vmatpush1.msra.mxu0 0.0
    %731 = vmatprep.subr.mxu0 0.0
    %732 = vmatpush1.msra.mxu0 0.0
    %733 = vmatprep.subr.mxu0 0.0
    %734 = vmatpush1.msra.mxu0 0.0
    %735 = vmatprep.subr.mxu0 0.0
    %736 = vmatpush1.msra.mxu0 0.0
    %737 = vmatprep.subr.mxu0 0.0
    %738 = vmatpush1.msra.mxu0 0.0
    %739 = vmatprep.subr.mxu0 0.0
    %740 = vmatpush1.msra.mxu0 0.0
    %741 = vmatprep.subr.mxu0 0.0
    %742 = vmatpush1.msra.mxu0 0.0
    %743 = vmatprep.subr.mxu0 0.0
    %744 = vmatpush1.msra.mxu0 0.0
    %745 = vmatprep.subr.mxu0 0.0
    %746 = vmatpush1.msra.mxu0 0.0
    %747 = vmatprep.subr.mxu0 0.0
    %748 = vmatpush1.msra.mxu0 0.0
    %749 = vmatprep.subr.mxu0 0.0
    %750 = vmatpush1.msra.mxu0 0.0
    %751 = vmatprep.subr.mxu0 0.0
    %752 = vmatpush1.msra.mxu0 0.0
    %753 = vmatprep.mubr.f32.mxu0 0.0
    %754 = vmatmul.mubr.f32.gmra.mrb[0].mxu0 %v684
    %v755 = vpop.f32.mrb[0].mxu0
    %v756 = vadd.f32 %v675, %v755
    %v757 = vpop.f32.mrb[0].mxu0
    %758 = vmatprep.mubr.f32.mxu0 0.0
    %759 = vmatmul.mubr.f32.gmra.mrb[0].mxu0 %v687
    %v760 = vpop.f32.mrb[0].mxu0
    %v761 = vadd.f32 %v680, %v760
    %v762 = vpop.f32.mrb[0].mxu0
    %763 = vdwg.mxu0
    %v764 = vld [vmem:[%s6] sm:$0xff]
    %v765 = vld [vmem:[%s6 + $0x8] sm:$0xff]
    %v766 = vld [vmem:[%s6 + $0x10] sm:$0xff]
    %v767 = vld [vmem:[%s6 + $0x18] sm:$0xff]
    %v768 = vld [vmem:[%s6 + $0x20] sm:$0xff]
    %v769 = vld [vmem:[%s6 + $0x28] sm:$0xff]
    %v770 = vld [vmem:[%s6 + $0x30] sm:$0xff]
    %v771 = vld [vmem:[%s6 + $0x38] sm:$0xff]
    %v772 = vld [vmem:[%s6 + $0x40] sm:$0xff]
    %v773 = vld [vmem:[%s6 + $0x48] sm:$0xff]
    %v774 = vld [vmem:[%s6 + $0x50] sm:$0xff]
    %v775 = vld [vmem:[%s6 + $0x58] sm:$0xff]
    %v776 = vld [vmem:[%s6 + $0x60] sm:$0xff]
    %v777 = vld [vmem:[%s6 + $0x68] sm:$0xff]
    %v778 = vld [vmem:[%s6 + $0x70] sm:$0xff]
    %v779 = vld [vmem:[%s6 + $0x78] sm:$0xff]
    %v780 = vld [vmem:[%s7] sm:$0x1]
    %v782 = vlaneseq
    %v783 = vshrl.u32 %v782, 7
    %v784 = vsub.s32 0, %v783
    %v785 = vrot.slane %v780, %v784
    %787 = vmatprep.subr.mxu0 0.0
    %788 = vmatpush1.msra.mxu0 %v764
    %789 = vmatprep.subr.mxu0 0.0
    %790 = vmatpush1.msra.mxu0 %v765
    %791 = vmatprep.subr.mxu0 0.0
    %792 = vmatpush1.msra.mxu0 %v766
    %793 = vmatprep.subr.mxu0 0.0
    %794 = vmatpush1.msra.mxu0 %v767
    %795 = vmatprep.subr.mxu0 0.0
    %796 = vmatpush1.msra.mxu0 %v768
    %797 = vmatprep.subr.mxu0 0.0
    %798 = vmatpush1.msra.mxu0 %v769
    %799 = vmatprep.subr.mxu0 0.0
    %800 = vmatpush1.msra.mxu0 %v770
    %801 = vmatprep.subr.mxu0 0.0
    %802 = vmatpush1.msra.mxu0 %v771
    %803 = vmatprep.subr.mxu0 0.0
    %804 = vmatpush1.msra.mxu0 %v772
    %805 = vmatprep.subr.mxu0 0.0
    %806 = vmatpush1.msra.mxu0 %v773
    %807 = vmatprep.subr.mxu0 0.0
    %808 = vmatpush1.msra.mxu0 %v774
    %809 = vmatprep.subr.mxu0 0.0
    %810 = vmatpush1.msra.mxu0 %v775
    %811 = vmatprep.subr.mxu0 0.0
    %812 = vmatpush1.msra.mxu0 %v776
    %813 = vmatprep.subr.mxu0 0.0
    %814 = vmatpush1.msra.mxu0 %v777
    %815 = vmatprep.subr.mxu0 0.0
    %816 = vmatpush1.msra.mxu0 %v778
    %817 = vmatprep.subr.mxu0 0.0
    %818 = vmatpush1.msra.mxu0 %v779
    %819 = vmatprep.subr.mxu0 0.0
    %820 = vmatpush1.msra.mxu0 0.0
    %821 = vmatprep.subr.mxu0 0.0
    %822 = vmatpush1.msra.mxu0 0.0
    %823 = vmatprep.subr.mxu0 0.0
    %824 = vmatpush1.msra.mxu0 0.0
    %825 = vmatprep.subr.mxu0 0.0
    %826 = vmatpush1.msra.mxu0 0.0
    %827 = vmatprep.subr.mxu0 0.0
    %828 = vmatpush1.msra.mxu0 0.0
    %829 = vmatprep.subr.mxu0 0.0
    %830 = vmatpush1.msra.mxu0 0.0
    %831 = vmatprep.subr.mxu0 0.0
    %832 = vmatpush1.msra.mxu0 0.0
    %833 = vmatprep.subr.mxu0 0.0
    %834 = vmatpush1.msra.mxu0 0.0
    %835 = vmatprep.subr.mxu0 0.0
    %836 = vmatpush1.msra.mxu0 0.0
    %837 = vmatprep.subr.mxu0 0.0
    %838 = vmatpush1.msra.mxu0 0.0
    %839 = vmatprep.subr.mxu0 0.0
    %840 = vmatpush1.msra.mxu0 0.0
    %841 = vmatprep.subr.mxu0 0.0
    %842 = vmatpush1.msra.mxu0 0.0
    %843 = vmatprep.subr.mxu0 0.0
    %844 = vmatpush1.msra.mxu0 0.0
    %845 = vmatprep.subr.mxu0 0.0
    %846 = vmatpush1.msra.mxu0 0.0
    %847 = vmatprep.subr.mxu0 0.0
    %848 = vmatpush1.msra.mxu0 0.0
    %849 = vmatprep.subr.mxu0 0.0
    %850 = vmatpush1.msra.mxu0 0.0
    %851 = vmatprep.mubr.f32.mxu0 0.0
    %852 = vmatmul.mubr.f32.gmra.mrb[0].mxu0 %v756
    %v853 = vpop.f32.mrb[0].mxu0
    %v854 = vadd.f32 %v785, %v853
    %v855 = vpop.f32.mrb[0].mxu0
    %856 = vmatprep.mubr.f32.mxu0 0.0
    %857 = vmatmul.mubr.f32.gmra.mrb[0].mxu0 %v761
    %v858 = vpop.f32.mrb[0].mxu0
    %v859 = vadd.f32 %v785, %v858
    %v860 = vpop.f32.mrb[0].mxu0
    %861 = vdwg.mxu0
    %v862 = vadd.f32 %v172, %v854
    %v863 = vadd.f32 %v173, %v859
    %v864 = vld [vmem:[%s8] sm:$0x1]
    %v865 = vld [vmem:[%s9] sm:$0x1]
    %866 = vadd.xlane.f32.xlu0 %v862
    %v867 = vpop.xlane.xlu0 %866
    %868 = vadd.xlane.f32.xlu0 %v863
    %v869 = vpop.xlane.xlu0 %868
    %v870 = vmul.f32 %v867, 0.03125
    %v871 = vmul.f32 %v869, 0.03125
    %v872 = vsub.f32 %v862, %v870
    %v873 = vsub.f32 %v863, %v871
    %v874 = vmul.f32 %v872, %v118
    %v875 = vmul.f32 %v873, %v118
    %v876 = vmul.f32 %v874, %v874
    %v877 = vmul.f32 %v875, %v875
    %878 = vadd.xlane.f32.xlu0 %v876
    %v879 = vpop.xlane.xlu0 %878
    %880 = vadd.xlane.f32.xlu0 %v877
    %v881 = vpop.xlane.xlu0 %880
    %v882 = vmul.f32 %v879, 0.03125
    %v883 = vmul.f32 %v881, 0.03125
    %v884 = vadd.f32 %v882, 1e-12
    %v885 = vadd.f32 %v883, 1e-12
    %v886 = vrsqrt.pop %v884
    %v887 = vrsqrt.pop %v885
    %v888 = vmul.f32 %v874, %v886
    %v889 = vmul.f32 %v875, %v887
    %v891 = vlaneseq
    %v892 = vshrl.u32 %v891, 7
    %v893 = vsub.s32 0, %v892
    %v894 = vrot.slane %v864, %v893
    %v896 = vmul.f32 %v888, %v894
    %v897 = vmul.f32 %v889, %v894
    %v899 = vlaneseq
    %v900 = vshrl.u32 %v899, 7
    %v901 = vsub.s32 0, %v900
    %v902 = vrot.slane %v865, %v901
    %v904 = vadd.f32 %v896, %v902
    %v905 = vadd.f32 %v897, %v902
    %v906 = vld [vmem:[#allocation4] sm:$0xff]
    %v907 = vld [vmem:[#allocation4 + $0x8] sm:$0xff]
    %v908 = vld [vmem:[#allocation4 + $0x10] sm:$0xff]
    %v909 = vld [vmem:[#allocation4 + $0x18] sm:$0xff]
    %v910 = vld [vmem:[#allocation4 + $0x20] sm:$0xff]
    %v911 = vld [vmem:[#allocation4 + $0x28] sm:$0xff]
    %v912 = vld [vmem:[#allocation4 + $0x30] sm:$0xff]
    %v913 = vld [vmem:[#allocation4 + $0x38] sm:$0xff]
    %v914 = vld [vmem:[#allocation4 + $0x40] sm:$0xff]
    %v915 = vld [vmem:[#allocation4 + $0x48] sm:$0xff]
    %v916 = vld [vmem:[#allocation4 + $0x50] sm:$0xff]
    %v917 = vld [vmem:[#allocation4 + $0x58] sm:$0xff]
    %v918 = vld [vmem:[#allocation4 + $0x60] sm:$0xff]
    %v919 = vld [vmem:[#allocation4 + $0x68] sm:$0xff]
    %v920 = vld [vmem:[#allocation4 + $0x70] sm:$0xff]
    %v921 = vld [vmem:[#allocation4 + $0x78] sm:$0xff]
    %v922 = vld [vmem:[%s11] sm:$0x1]
    %v924 = vlaneseq
    %v925 = vshrl.u32 %v924, 7
    %v926 = vsub.s32 0, %v925
    %v927 = vrot.slane %v922, %v926
    %929 = vmatprep.subr.mxu0 0.0
    %930 = vmatpush1.msra.mxu0 %v906
    %931 = vmatprep.subr.mxu0 0.0
    %932 = vmatpush1.msra.mxu0 %v907
    %933 = vmatprep.subr.mxu0 0.0
    %934 = vmatpush1.msra.mxu0 %v908
    %935 = vmatprep.subr.mxu0 0.0
    %936 = vmatpush1.msra.mxu0 %v909
    %937 = vmatprep.subr.mxu0 0.0
    %938 = vmatpush1.msra.mxu0 %v910
    %939 = vmatprep.subr.mxu0 0.0
    %940 = vmatpush1.msra.mxu0 %v911
    %941 = vmatprep.subr.mxu0 0.0
    %942 = vmatpush1.msra.mxu0 %v912
    %943 = vmatprep.subr.mxu0 0.0
    %944 = vmatpush1.msra.mxu0 %v913
    %945 = vmatprep.subr.mxu0 0.0
    %946 = vmatpush1.msra.mxu0 %v914
    %947 = vmatprep.subr.mxu0 0.0
    %948 = vmatpush1.msra.mxu0 %v915
    %949 = vmatprep.subr.mxu0 0.0
    %950 = vmatpush1.msra.mxu0 %v916
    %951 = vmatprep.subr.mxu0 0.0
    %952 = vmatpush1.msra.mxu0 %v917
    %953 = vmatprep.subr.mxu0 0.0
    %954 = vmatpush1.msra.mxu0 %v918
    %955 = vmatprep.subr.mxu0 0.0
    %956 = vmatpush1.msra.mxu0 %v919
    %957 = vmatprep.subr.mxu0 0.0
    %958 = vmatpush1.msra.mxu0 %v920
    %959 = vmatprep.subr.mxu0 0.0
    %960 = vmatpush1.msra.mxu0 %v921
    %961 = vmatprep.subr.mxu0 0.0
    %962 = vmatpush1.msra.mxu0 0.0
    %963 = vmatprep.subr.mxu0 0.0
    %964 = vmatpush1.msra.mxu0 0.0
    %965 = vmatprep.subr.mxu0 0.0
    %966 = vmatpush1.msra.mxu0 0.0
    %967 = vmatprep.subr.mxu0 0.0
    %968 = vmatpush1.msra.mxu0 0.0
    %969 = vmatprep.subr.mxu0 0.0
    %970 = vmatpush1.msra.mxu0 0.0
    %971 = vmatprep.subr.mxu0 0.0
    %972 = vmatpush1.msra.mxu0 0.0
    %973 = vmatprep.subr.mxu0 0.0
    %974 = vmatpush1.msra.mxu0 0.0
    %975 = vmatprep.subr.mxu0 0.0
    %976 = vmatpush1.msra.mxu0 0.0
    %977 = vmatprep.subr.mxu0 0.0
    %978 = vmatpush1.msra.mxu0 0.0
    %979 = vmatprep.subr.mxu0 0.0
    %980 = vmatpush1.msra.mxu0 0.0
    %981 = vmatprep.subr.mxu0 0.0
    %982 = vmatpush1.msra.mxu0 0.0
    %983 = vmatprep.subr.mxu0 0.0
    %984 = vmatpush1.msra.mxu0 0.0
    %985 = vmatprep.subr.mxu0 0.0
    %986 = vmatpush1.msra.mxu0 0.0
    %987 = vmatprep.subr.mxu0 0.0
    %988 = vmatpush1.msra.mxu0 0.0
    %989 = vmatprep.subr.mxu0 0.0
    %990 = vmatpush1.msra.mxu0 0.0
    %991 = vmatprep.subr.mxu0 0.0
    %992 = vmatpush1.msra.mxu0 0.0
    %993 = vmatprep.mubr.f32.mxu0 0.0
    %994 = vmatmul.mubr.f32.gmra.mrb[0].mxu0 %v904
    %v995 = vpop.f32.mrb[0].mxu0
    %v996 = vadd.f32 %v927, %v995
    %v997 = vpop.f32.mrb[0].mxu0
    %998 = vmatprep.mubr.f32.mxu0 0.0
    %999 = vmatmul.mubr.f32.gmra.mrb[0].mxu0 %v905
    %v1000 = vpop.f32.mrb[0].mxu0
    %v1001 = vadd.f32 %v927, %v1000
    %v1002 = vpop.f32.mrb[0].mxu0
    %1003 = vdwg.mxu0
    %v1004 = vmul.f32 %v996, %v996
    %v1005 = vmul.f32 %v1001, %v1001
    %v1006 = vmul.f32 %v996, %v1004
    %v1007 = vmul.f32 %v1001, %v1005
    %v1008 = vmul.f32 %v1006, 0.044715
    %v1009 = vmul.f32 %v1007, 0.044715
    %v1010 = vadd.f32 %v996, %v1008
    %v1011 = vadd.f32 %v1001, %v1009
    %v1012 = vmul.f32 %v1010, 0.7978846
    %v1013 = vmul.f32 %v1011, 0.7978846
    %v1014 = vtanh.pop %v1012
    %v1015 = vtanh.pop %v1013
    %v1016 = vadd.f32 %v1014, 1.0
    %v1017 = vadd.f32 %v1015, 1.0
    %v1018 = vmul.f32 %v1016, 0.5
    %v1019 = vmul.f32 %v1017, 0.5
    %v1020 = vmul.f32 %v996, %v1018
    %v1021 = vmul.f32 %v1001, %v1019
    %v1022 = vld [vmem:[#allocation6] sm:$0xff]
    %v1023 = vld [vmem:[#allocation6 + $0x8] sm:$0xff]
    %v1024 = vld [vmem:[#allocation6 + $0x10] sm:$0xff]
    %v1025 = vld [vmem:[#allocation6 + $0x18] sm:$0xff]
    %v1026 = vld [vmem:[#allocation6 + $0x20] sm:$0xff]
    %v1027 = vld [vmem:[#allocation6 + $0x28] sm:$0xff]
    %v1028 = vld [vmem:[#allocation6 + $0x30] sm:$0xff]
    %v1029 = vld [vmem:[#allocation6 + $0x38] sm:$0xff]
    %v1030 = vld [vmem:[#allocation6 + $0x40] sm:$0xff]
    %v1031 = vld [vmem:[#allocation6 + $0x48] sm:$0xff]
    %v1032 = vld [vmem:[#allocation6 + $0x50] sm:$0xff]
    %v1033 = vld [vmem:[#allocation6 + $0x58] sm:$0xff]
    %v1034 = vld [vmem:[#allocation6 + $0x60] sm:$0xff]
    %v1035 = vld [vmem:[#allocation6 + $0x68] sm:$0xff]
    %v1036 = vld [vmem:[#allocation6 + $0x70] sm:$0xff]
    %v1037 = vld [vmem:[#allocation6 + $0x78] sm:$0xff]
    %v1038 = vld [vmem:[%s13] sm:$0x1]
    %v1040 = vlaneseq
    %v1041 = vshrl.u32 %v1040, 7
    %v1042 = vsub.s32 0, %v1041
    %v1043 = vrot.slane %v1038, %v1042
    %1045 = vmatprep.subr.mxu0 0.0
    %1046 = vmatpush1.msra.mxu0 %v1022
    %1047 = vmatprep.subr.mxu0 0.0
    %1048 = vmatpush1.msra.mxu0 %v1023
    %1049 = vmatprep.subr.mxu0 0.0
    %1050 = vmatpush1.msra.mxu0 %v1024
    %1051 = vmatprep.subr.mxu0 0.0
    %1052 = vmatpush1.msra.mxu0 %v1025
    %1053 = vmatprep.subr.mxu0 0.0
    %1054 = vmatpush1.msra.mxu0 %v1026
    %1055 = vmatprep.subr.mxu0 0.0
    %1056 = vmatpush1.msra.mxu0 %v1027
    %1057 = vmatprep.subr.mxu0 0.0
    %1058 = vmatpush1.msra.mxu0 %v1028
    %1059 = vmatprep.subr.mxu0 0.0
    %1060 = vmatpush1.msra.mxu0 %v1029
    %1061 = vmatprep.subr.mxu0 0.0
    %1062 = vmatpush1.msra.mxu0 %v1030
    %1063 = vmatprep.subr.mxu0 0.0
    %1064 = vmatpush1.msra.mxu0 %v1031
    %1065 = vmatprep.subr.mxu0 0.0
    %1066 = vmatpush1.msra.mxu0 %v1032
    %1067 = vmatprep.subr.mxu0 0.0
    %1068 = vmatpush1.msra.mxu0 %v1033
    %1069 = vmatprep.subr.mxu0 0.0
    %1070 = vmatpush1.msra.mxu0 %v1034
    %1071 = vmatprep.subr.mxu0 0.0
    %1072 = vmatpush1.msra.mxu0 %v1035
    %1073 = vmatprep.subr.mxu0 0.0
    %1074 = vmatpush1.msra.mxu0 %v1036
    %1075 = vmatprep.subr.mxu0 0.0
    %1076 = vmatpush1.msra.mxu0 %v1037
    %1077 = vmatprep.subr.mxu0 0.0
    %1078 = vmatpush1.msra.mxu0 0.0
    %1079 = vmatprep.subr.mxu0 0.0
    %1080 = vmatpush1.msra.mxu0 0.0
    %1081 = vmatprep.subr.mxu0 0.0
    %1082 = vmatpush1.msra.mxu0 0.0
    %1083 = vmatprep.subr.mxu0 0.0
    %1084 = vmatpush1.msra.mxu0 0.0
    %1085 = vmatprep.subr.mxu0 0.0
    %1086 = vmatpush1.msra.mxu0 0.0
    %1087 = vmatprep.subr.mxu0 0.0
    %1088 = vmatpush1.msra.mxu0 0.0
    %1089 = vmatprep.subr.mxu0 0.0
    %1090 = vmatpush1.msra.mxu0 0.0
    %1091 = vmatprep.subr.mxu0 0.0
    %1092 = vmatpush1.msra.mxu0 0.0
    %1093 = vmatprep.subr.mxu0 0.0
    %1094 = vmatpush1.msra.mxu0 0.0
    %1095 = vmatprep.subr.mxu0 0.0
    %1096 = vmatpush1.msra.mxu0 0.0
    %1097 = vmatprep.subr.mxu0 0.0
    %1098 = vmatpush1.msra.mxu0 0.0
    %1099 = vmatprep.subr.mxu0 0.0
    %1100 = vmatpush1.msra.mxu0 0.0
    %1101 = vmatprep.subr.mxu0 0.0
    %1102 = vmatpush1.msra.mxu0 0.0
    %1103 = vmatprep.subr.mxu0 0.0
    %1104 = vmatpush1.msra.mxu0 0.0
    %1105 = vmatprep.subr.mxu0 0.0
    %1106 = vmatpush1.msra.mxu0 0.0
    %1107 = vmatprep.subr.mxu0 0.0
    %1108 = vmatpush1.msra.mxu0 0.0
    %1109 = vmatprep.mubr.f32.mxu0 0.0
    %1110 = vmatmul.mubr.f32.gmra.mrb[0].mxu0 %v1020
    %v1111 = vpop.f32.mrb[0].mxu0
    %v1112 = vadd.f32 %v1043, %v1111
    %v1113 = vpop.f32.mrb[0].mxu0
    %1114 = vmatprep.mubr.f32.mxu0 0.0
    %1115 = vmatmul.mubr.f32.gmra.mrb[0].mxu0 %v1021
    %v1116 = vpop.f32.mrb[0].mxu0
    %v1117 = vadd.f32 %v1043, %v1116
    %v1118 = vpop.f32.mrb[0].mxu0
    %1119 = vdwg.mxu0
    %v1120 = vadd.f32 %v904, %v1112
    %v1121 = vadd.f32 %v905, %v1117
    %v1122 = vld [vmem:[%s14] sm:$0x1]
    %v1123 = vld [vmem:[%s15] sm:$0x1]
    %1124 = vadd.xlane.f32.xlu0 %v1120
    %v1125 = vpop.xlane.xlu0 %1124
    %1126 = vadd.xlane.f32.xlu0 %v1121
    %v1127 = vpop.xlane.xlu0 %1126
    %v1128 = vmul.f32 %v1125, 0.03125
    %v1129 = vmul.f32 %v1127, 0.03125
    %v1130 = vsub.f32 %v1120, %v1128
    %v1131 = vsub.f32 %v1121, %v1129
    %v1132 = vmul.f32 %v1130, %v118
    %v1133 = vmul.f32 %v1131, %v118
    %v1134 = vmul.f32 %v1132, %v1132
    %v1135 = vmul.f32 %v1133, %v1133
    %1136 = vadd.xlane.f32.xlu0 %v1134
    %v1137 = vpop.xlane.xlu0 %1136
    %1138 = vadd.xlane.f32.xlu0 %v1135
    %v1139 = vpop.xlane.xlu0 %1138
    %v1140 = vmul.f32 %v1137, 0.03125
    %v1141 = vmul.f32 %v1139, 0.03125
    %v1142 = vadd.f32 %v1140, 1e-12
    %v1143 = vadd.f32 %v1141, 1e-12
    %v1144 = vrsqrt.pop %v1142
    %v1145 = vrsqrt.pop %v1143
    %v1146 = vmul.f32 %v1132, %v1144
    %v1147 = vmul.f32 %v1133, %v1145
    %v1149 = vlaneseq
    %v1150 = vshrl.u32 %v1149, 7
    %v1151 = vsub.s32 0, %v1150
    %v1152 = vrot.slane %v1122, %v1151
    %v1154 = vmul.f32 %v1146, %v1152
    %v1155 = vmul.f32 %v1147, %v1152
    %v1157 = vlaneseq
    %v1158 = vshrl.u32 %v1157, 7
    %v1159 = vsub.s32 0, %v1158
    %v1160 = vrot.slane %v1123, %v1159
    %v1162 = vadd.f32 %v1154, %v1160
    %v1163 = vadd.f32 %v1155, %v1160
    %s1164 = scalar_lea.vmem [#allocation2], 384
    %v1165 = vld [vmem:[%s1164] sm:$0xff]
    %v1166 = vld [vmem:[%s1164 + $0x8] sm:$0xff]
    %v1167 = vld [vmem:[%s1164 + $0x10] sm:$0xff]
    %v1168 = vld [vmem:[%s1164 + $0x18] sm:$0xff]
    %v1169 = vld [vmem:[%s1164 + $0x20] sm:$0xff]
    %v1170 = vld [vmem:[%s1164 + $0x28] sm:$0xff]
    %v1171 = vld [vmem:[%s1164 + $0x30] sm:$0xff]
    %v1172 = vld [vmem:[%s1164 + $0x38] sm:$0xff]
    %v1173 = vld [vmem:[%s1164 + $0x40] sm:$0xff]
    %v1174 = vld [vmem:[%s1164 + $0x48] sm:$0xff]
    %v1175 = vld [vmem:[%s1164 + $0x50] sm:$0xff]
    %v1176 = vld [vmem:[%s1164 + $0x58] sm:$0xff]
    %v1177 = vld [vmem:[%s1164 + $0x60] sm:$0xff]
    %v1178 = vld [vmem:[%s1164 + $0x68] sm:$0xff]
    %v1179 = vld [vmem:[%s1164 + $0x70] sm:$0xff]
    %v1180 = vld [vmem:[%s1164 + $0x78] sm:$0xff]
    %v1181 = vld [vmem:[%s1164 + $0x80] sm:$0xff]
    %v1182 = vld [vmem:[%s1164 + $0x88] sm:$0xff]
    %v1183 = vld [vmem:[%s1164 + $0x90] sm:$0xff]
    %v1184 = vld [vmem:[%s1164 + $0x98] sm:$0xff]
    %v1185 = vld [vmem:[%s1164 + $0xa0] sm:$0xff]
    %v1186 = vld [vmem:[%s1164 + $0xa8] sm:$0xff]
    %v1187 = vld [vmem:[%s1164 + $0xb0] sm:$0xff]
    %v1188 = vld [vmem:[%s1164 + $0xb8] sm:$0xff]
    %v1189 = vld [vmem:[%s1164 + $0xc0] sm:$0xff]
    %v1190 = vld [vmem:[%s1164 + $0xc8] sm:$0xff]
    %v1191 = vld [vmem:[%s1164 + $0xd0] sm:$0xff]
    %v1192 = vld [vmem:[%s1164 + $0xd8] sm:$0xff]
    %v1193 = vld [vmem:[%s1164 + $0xe0] sm:$0xff]
    %v1194 = vld [vmem:[%s1164 + $0xe8] sm:$0xff]
    %v1195 = vld [vmem:[%s1164 + $0xf0] sm:$0xff]
    %v1196 = vld [vmem:[%s1164 + $0xf8] sm:$0xff]
    %v1197 = vld [vmem:[%s1164 + $0x100] sm:$0xff]
    %v1198 = vld [vmem:[%s1164 + $0x108] sm:$0xff]
    %v1199 = vld [vmem:[%s1164 + $0x110] sm:$0xff]
    %v1200 = vld [vmem:[%s1164 + $0x118] sm:$0xff]
    %v1201 = vld [vmem:[%s1164 + $0x120] sm:$0xff]
    %v1202 = vld [vmem:[%s1164 + $0x128] sm:$0xff]
    %v1203 = vld [vmem:[%s1164 + $0x130] sm:$0xff]
    %v1204 = vld [vmem:[%s1164 + $0x138] sm:$0xff]
    %v1205 = vld [vmem:[%s1164 + $0x140] sm:$0xff]
    %v1206 = vld [vmem:[%s1164 + $0x148] sm:$0xff]
    %v1207 = vld [vmem:[%s1164 + $0x150] sm:$0xff]
    %v1208 = vld [vmem:[%s1164 + $0x158] sm:$0xff]
    %v1209 = vld [vmem:[%s1164 + $0x160] sm:$0xff]
    %v1210 = vld [vmem:[%s1164 + $0x168] sm:$0xff]
    %v1211 = vld [vmem:[%s1164 + $0x170] sm:$0xff]
    %v1212 = vld [vmem:[%s1164 + $0x178] sm:$0xff]
    %s1213 = scalar_lea.vmem %s5, 3
    %v1214 = vld [vmem:[%s1213] sm:$0x7]
    %v1216 = vlaneseq
    %v1217 = vshrl.u32 %v1216, 7
    %v1218 = vsub.s32 0, %v1217
    %v1219 = vrot.slane %v1214, %v1218
    %v1220 = vlaneseq
    %v1221 = vshrl.u32 %v1220, 7
    %v1222 = vsub.s32 1, %v1221
    %v1223 = vrot.slane %v1214, %v1222
    %v1224 = vlaneseq
    %v1225 = vshrl.u32 %v1224, 7
    %v1226 = vsub.s32 2, %v1225
    %v1227 = vrot.slane %v1214, %v1226
    %1231 = vmatprep.subr.mxu0 %v1166
    %1232 = vmatpush1.msra.mxu0 %v1165
    %1233 = vmatprep.subr.mxu0 %v1169
    %1234 = vmatpush1.msra.mxu0 %v1168
    %1235 = vmatprep.subr.mxu0 %v1172
    %1236 = vmatpush1.msra.mxu0 %v1171
    %1237 = vmatprep.subr.mxu0 %v1175
    %1238 = vmatpush1.msra.mxu0 %v1174
    %1239 = vmatprep.subr.mxu0 %v1178
    %1240 = vmatpush1.msra.mxu0 %v1177
    %1241 = vmatprep.subr.mxu0 %v1181
    %1242 = vmatpush1.msra.mxu0 %v1180
    %1243 = vmatprep.subr.mxu0 %v1184
    %1244 = vmatpush1.msra.mxu0 %v1183
    %1245 = vmatprep.subr.mxu0 %v1187
    %1246 = vmatpush1.msra.mxu0 %v1186
    %1247 = vmatprep.subr.mxu0 %v1190
    %1248 = vmatpush1.msra.mxu0 %v1189
    %1249 = vmatprep.subr.mxu0 %v1193
    %1250 = vmatpush1.msra.mxu0 %v1192
    %1251 = vmatprep.subr.mxu0 %v1196
    %1252 = vmatpush1.msra.mxu0 %v1195
    %1253 = vmatprep.subr.mxu0 %v1199
    %1254 = vmatpush1.msra.mxu0 %v1198
    %1255 = vmatprep.subr.mxu0 %v1202
    %1256 = vmatpush1.msra.mxu0 %v1201
    %1257 = vmatprep.subr.mxu0 %v1205
    %1258 = vmatpush1.msra.mxu0 %v1204
    %1259 = vmatprep.subr.mxu0 %v1208
    %1260 = vmatpush1.msra.mxu0 %v1207
    %1261 = vmatprep.subr.mxu0 %v1211
    %1262 = vmatpush1.msra.mxu0 %v1210
    %1263 = vmatprep.subr.mxu0 0.0
    %1264 = vmatpush1.msra.mxu0 0.0
    %1265 = vmatprep.subr.mxu0 0.0
    %1266 = vmatpush1.msra.mxu0 0.0
    %1267 = vmatprep.subr.mxu0 0.0
    %1268 = vmatpush1.msra.mxu0 0.0
    %1269 = vmatprep.subr.mxu0 0.0
    %1270 = vmatpush1.msra.mxu0 0.0
    %1271 = vmatprep.subr.mxu0 0.0
    %1272 = vmatpush1.msra.mxu0 0.0
    %1273 = vmatprep.subr.mxu0 0.0
    %1274 = vmatpush1.msra.mxu0 0.0
    %1275 = vmatprep.subr.mxu0 0.0
    %1276 = vmatpush1.msra.mxu0 0.0
    %1277 = vmatprep.subr.mxu0 0.0
    %1278 = vmatpush1.msra.mxu0 0.0
    %1279 = vmatprep.subr.mxu0 0.0
    %1280 = vmatpush1.msra.mxu0 0.0
    %1281 = vmatprep.subr.mxu0 0.0
    %1282 = vmatpush1.msra.mxu0 0.0
    %1283 = vmatprep.subr.mxu0 0.0
    %1284 = vmatpush1.msra.mxu0 0.0
    %1285 = vmatprep.subr.mxu0 0.0
    %1286 = vmatpush1.msra.mxu0 0.0
    %1287 = vmatprep.subr.mxu0 0.0
    %1288 = vmatpush1.msra.mxu0 0.0
    %1289 = vmatprep.subr.mxu0 0.0
    %1290 = vmatpush1.msra.mxu0 0.0
    %1291 = vmatprep.subr.mxu0 0.0
    %1292 = vmatpush1.msra.mxu0 0.0
    %1293 = vmatprep.subr.mxu0 0.0
    %1294 = vmatpush1.msra.mxu0 0.0
    %1295 = vmatprep.mubr.f32.mxu0 0.0
    %1296 = vmatmul.mubr.f32.gmra.mrb[0].mxu0 %v1162
    %v1297 = vpop.f32.mrb[0].mxu0
    %v1298 = vadd.f32 %v1219, %v1297
    %v1299 = vpop.f32.mrb[0].mxu0
    %v1300 = vadd.f32 %v1223, %v1299
    %1301 = vmatprep.mubr.f32.mxu0 0.0
    %1302 = vmatmul.mubr.f32.gmra.mrb[0].mxu0 %v1163
    %v1303 = vpop.f32.mrb[0].mxu0
    %v1304 = vadd.f32 %v1219, %v1303
    %v1305 = vpop.f32.mrb[0].mxu0
    %v1306 = vadd.f32 %v1223, %v1305
    %1307 = vdwg.mxu0
    %1308 = vmatprep.subr.mxu0 0.0
    %1309 = vmatpush1.msra.mxu0 %v1167
    %1310 = vmatprep.subr.mxu0 0.0
    %1311 = vmatpush1.msra.mxu0 %v1170
    %1312 = vmatprep.subr.mxu0 0.0
    %1313 = vmatpush1.msra.mxu0 %v1173
    %1314 = vmatprep.subr.mxu0 0.0
    %1315 = vmatpush1.msra.mxu0 %v1176
    %1316 = vmatprep.subr.mxu0 0.0
    %1317 = vmatpush1.msra.mxu0 %v1179
    %1318 = vmatprep.subr.mxu0 0.0
    %1319 = vmatpush1.msra.mxu0 %v1182
    %1320 = vmatprep.subr.mxu0 0.0
    %1321 = vmatpush1.msra.mxu0 %v1185
    %1322 = vmatprep.subr.mxu0 0.0
    %1323 = vmatpush1.msra.mxu0 %v1188
    %1324 = vmatprep.subr.mxu0 0.0
    %1325 = vmatpush1.msra.mxu0 %v1191
    %1326 = vmatprep.subr.mxu0 0.0
    %1327 = vmatpush1.msra.mxu0 %v1194
    %1328 = vmatprep.subr.mxu0 0.0
    %1329 = vmatpush1.msra.mxu0 %v1197
    %1330 = vmatprep.subr.mxu0 0.0
    %1331 = vmatpush1.msra.mxu0 %v1200
    %1332 = vmatprep.subr.mxu0 0.0
    %1333 = vmatpush1.msra.mxu0 %v1203
    %1334 = vmatprep.subr.mxu0 0.0
    %1335 = vmatpush1.msra.mxu0 %v1206
    %1336 = vmatprep.subr.mxu0 0.0
    %1337 = vmatpush1.msra.mxu0 %v1209
    %1338 = vmatprep.subr.mxu0 0.0
    %1339 = vmatpush1.msra.mxu0 %v1212
    %1340 = vmatprep.subr.mxu0 0.0
    %1341 = vmatpush1.msra.mxu0 0.0
    %1342 = vmatprep.subr.mxu0 0.0
    %1343 = vmatpush1.msra.mxu0 0.0
    %1344 = vmatprep.subr.mxu0 0.0
    %1345 = vmatpush1.msra.mxu0 0.0
    %1346 = vmatprep.subr.mxu0 0.0
    %1347 = vmatpush1.msra.mxu0 0.0
    %1348 = vmatprep.subr.mxu0 0.0
    %1349 = vmatpush1.msra.mxu0 0.0
    %1350 = vmatprep.subr.mxu0 0.0
    %1351 = vmatpush1.msra.mxu0 0.0
    %1352 = vmatprep.subr.mxu0 0.0
    %1353 = vmatpush1.msra.mxu0 0.0
    %1354 = vmatprep.subr.mxu0 0.0
    %1355 = vmatpush1.msra.mxu0 0.0
    %1356 = vmatprep.subr.mxu0 0.0
    %1357 = vmatpush1.msra.mxu0 0.0
    %1358 = vmatprep.subr.mxu0 0.0
    %1359 = vmatpush1.msra.mxu0 0.0
    %1360 = vmatprep.subr.mxu0 0.0
    %1361 = vmatpush1.msra.mxu0 0.0
    %1362 = vmatprep.subr.mxu0 0.0
    %1363 = vmatpush1.msra.mxu0 0.0
    %1364 = vmatprep.subr.mxu0 0.0
    %1365 = vmatpush1.msra.mxu0 0.0
    %1366 = vmatprep.subr.mxu0 0.0
    %1367 = vmatpush1.msra.mxu0 0.0
    %1368 = vmatprep.subr.mxu0 0.0
    %1369 = vmatpush1.msra.mxu0 0.0
    %1370 = vmatprep.subr.mxu0 0.0
    %1371 = vmatpush1.msra.mxu0 0.0
    %1372 = vmatprep.mubr.f32.mxu0 0.0
    %1373 = vmatmul.mubr.f32.gmra.mrb[0].mxu0 %v1162
    %v1374 = vpop.f32.mrb[0].mxu0
    %v1375 = vadd.f32 %v1227, %v1374
    %v1376 = vpop.f32.mrb[0].mxu0
    %1377 = vmatprep.mubr.f32.mxu0 0.0
    %1378 = vmatmul.mubr.f32.gmra.mrb[0].mxu0 %v1163
    %v1379 = vpop.f32.mrb[0].mxu0
    %v1380 = vadd.f32 %v1227, %v1379
    %v1381 = vpop.f32.mrb[0].mxu0
    %1382 = vdwg.mxu0
    %v1383 = vmul.f32 %v1298, %v123
    %v1384 = vmul.f32 %v1304, %v123
    %1385 = vmatprep.subr.mxu0 0.0
    %1386 = vmatpush1.xpose.msra.mxu0 %v1300
    %1387 = vmatprep.subr.mxu0 0.0
    %1388 = vmatpush1.xpose.msra.mxu0 %v1306
    %1389 = vmatprep.subr.mxu0 0.0
    %1390 = vmatpush1.xpose.msra.mxu0 0.0
    %1391 = vmatprep.subr.mxu0 0.0
    %1392 = vmatpush1.xpose.msra.mxu0 0.0
    %1393 = vmatprep.subr.mxu0 0.0
    %1394 = vmatpush1.xpose.msra.mxu0 0.0
    %1395 = vmatprep.subr.mxu0 0.0
    %1396 = vmatpush1.xpose.msra.mxu0 0.0
    %1397 = vmatprep.subr.mxu0 0.0
    %1398 = vmatpush1.xpose.msra.mxu0 0.0
    %1399 = vmatprep.subr.mxu0 0.0
    %1400 = vmatpush1.xpose.msra.mxu0 0.0
    %1401 = vmatprep.subr.mxu0 0.0
    %1402 = vmatpush1.xpose.msra.mxu0 0.0
    %1403 = vmatprep.subr.mxu0 0.0
    %1404 = vmatpush1.xpose.msra.mxu0 0.0
    %1405 = vmatprep.subr.mxu0 0.0
    %1406 = vmatpush1.xpose.msra.mxu0 0.0
    %1407 = vmatprep.subr.mxu0 0.0
    %1408 = vmatpush1.xpose.msra.mxu0 0.0
    %1409 = vmatprep.subr.mxu0 0.0
    %1410 = vmatpush1.xpose.msra.mxu0 0.0
    %1411 = vmatprep.subr.mxu0 0.0
    %1412 = vmatpush1.xpose.msra.mxu0 0.0
    %1413 = vmatprep.subr.mxu0 0.0
    %1414 = vmatpush1.xpose.msra.mxu0 0.0
    %1415 = vmatprep.subr.mxu0 0.0
    %1416 = vmatpush1.xpose.msra.mxu0 0.0
    %1417 = vmatprep.subr.mxu0 0.0
    %1418 = vmatpush1.xpose.msra.mxu0 0.0
    %1419 = vmatprep.subr.mxu0 0.0
    %1420 = vmatpush1.xpose.msra.mxu0 0.0
    %1421 = vmatprep.subr.mxu0 0.0
    %1422 = vmatpush1.xpose.msra.mxu0 0.0
    %1423 = vmatprep.subr.mxu0 0.0
    %1424 = vmatpush1.xpose.msra.mxu0 0.0
    %1425 = vmatprep.subr.mxu0 0.0
    %1426 = vmatpush1.xpose.msra.mxu0 0.0
    %1427 = vmatprep.subr.mxu0 0.0
    %1428 = vmatpush1.xpose.msra.mxu0 0.0
    %1429 = vmatprep.subr.mxu0 0.0
    %1430 = vmatpush1.xpose.msra.mxu0 0.0
    %1431 = vmatprep.subr.mxu0 0.0
    %1432 = vmatpush1.xpose.msra.mxu0 0.0
    %1433 = vmatprep.subr.mxu0 0.0
    %1434 = vmatpush1.xpose.msra.mxu0 0.0
    %1435 = vmatprep.subr.mxu0 0.0
    %1436 = vmatpush1.xpose.msra.mxu0 0.0
    %1437 = vmatprep.subr.mxu0 0.0
    %1438 = vmatpush1.xpose.msra.mxu0 0.0
    %1439 = vmatprep.subr.mxu0 0.0
    %1440 = vmatpush1.xpose.msra.mxu0 0.0
    %1441 = vmatprep.subr.mxu0 0.0
    %1442 = vmatpush1.xpose.msra.mxu0 0.0
    %1443 = vmatprep.subr.mxu0 0.0
    %1444 = vmatpush1.xpose.msra.mxu0 0.0
    %1445 = vmatprep.subr.mxu0 0.0
    %1446 = vmatpush1.xpose.msra.mxu0 0.0
    %1447 = vmatprep.subr.mxu0 0.0
    %1448 = vmatpush1.xpose.msra.mxu0 0.0
    %1449 = vmatprep.mubr.f32.mxu0 0.0
    %1450 = vmatmul.mubr.f32.gmra.mrb[0].mxu0 %v1383
    %v1451 = vpop.f32.mrb[0].mxu0
    %v1452 = vadd.f32 0.0, %v1451
    %v1453 = vpop.f32.mrb[0].mxu0
    %1454 = vmatprep.mubr.f32.mxu0 0.0
    %1455 = vmatmul.mubr.f32.gmra.mrb[0].mxu0 %v1384
    %v1456 = vpop.f32.mrb[0].mxu0
    %v1457 = vadd.f32 0.0, %v1456
    %v1458 = vpop.f32.mrb[0].mxu0
    %1459 = vdwg.mxu0
    %v1460 = vmul.f32 %v1452, 0.25
    %v1461 = vmul.f32 %v1457, 0.25
    %v1462 = vadd.f32 %v1460, %v128
    %v1463 = vadd.f32 %v1461, %v129
    %v1464 = vsel %vm472, %v1462, -inf
    %1465 = vmax.xlane.f32.xlu0 %v1464
    %v1466 = vpop.xlane.xlu0 %1465
    %v1467 = vsel %vm472, %v1463, -inf
    %1468 = vmax.xlane.f32.xlu0 %v1467
    %v1469 = vpop.xlane.xlu0 %1468
    %v1470 = vsub.f32 %v1462, %v1466
    %v1471 = vsub.f32 %v1463, %v1469
    %v1472 = vmul.f32 %v1470, 1.442695
    %v1473 = vpow.pop %v1472
    %v1474 = vmul.f32 %v1471, 1.442695
    %v1475 = vpow.pop %v1474
    %v1476 = vsel %vm472, %v1473, 0.0
    %1477 = vadd.xlane.f32.xlu0 %v1476
    %v1478 = vpop.xlane.xlu0 %1477
    %v1479 = vsel %vm472, %v1475, 0.0
    %1480 = vadd.xlane.f32.xlu0 %v1479
    %v1481 = vpop.xlane.xlu0 %1480
    %v1482 = vrcp.pop %v1478
    %v1483 = vrcp.pop %v1481
    %v1484 = vmul.f32 %v1473, %v1482
    %v1485 = vmul.f32 %v1475, %v1483
    %v1486 = vmul.f32 %v1375, %v123
    %v1487 = vmul.f32 %v1380, %v123
    %v1488 = vmul.f32 %v1298, %v127
    %v1489 = vmul.f32 %v1304, %v127
    %1490 = vmatprep.subr.mxu0 0.0
    %1491 = vmatpush1.xpose.msra.mxu0 %v1300
    %1492 = vmatprep.subr.mxu0 0.0
    %1493 = vmatpush1.xpose.msra.mxu0 %v1306
    %1494 = vmatprep.subr.mxu0 0.0
    %1495 = vmatpush1.xpose.msra.mxu0 0.0
    %1496 = vmatprep.subr.mxu0 0.0
    %1497 = vmatpush1.xpose.msra.mxu0 0.0
    %1498 = vmatprep.subr.mxu0 0.0
    %1499 = vmatpush1.xpose.msra.mxu0 0.0
    %1500 = vmatprep.subr.mxu0 0.0
    %1501 = vmatpush1.xpose.msra.mxu0 0.0
    %1502 = vmatprep.subr.mxu0 0.0
    %1503 = vmatpush1.xpose.msra.mxu0 0.0
    %1504 = vmatprep.subr.mxu0 0.0
    %1505 = vmatpush1.xpose.msra.mxu0 0.0
    %1506 = vmatprep.subr.mxu0 0.0
    %1507 = vmatpush1.xpose.msra.mxu0 0.0
    %1508 = vmatprep.subr.mxu0 0.0
    %1509 = vmatpush1.xpose.msra.mxu0 0.0
    %1510 = vmatprep.subr.mxu0 0.0
    %1511 = vmatpush1.xpose.msra.mxu0 0.0
    %1512 = vmatprep.subr.mxu0 0.0
    %1513 = vmatpush1.xpose.msra.mxu0 0.0
    %1514 = vmatprep.subr.mxu0 0.0
    %1515 = vmatpush1.xpose.msra.mxu0 0.0
    %1516 = vmatprep.subr.mxu0 0.0
    %1517 = vmatpush1.xpose.msra.mxu0 0.0
    %1518 = vmatprep.subr.mxu0 0.0
    %1519 = vmatpush1.xpose.msra.mxu0 0.0
    %1520 = vmatprep.subr.mxu0 0.0
    %1521 = vmatpush1.xpose.msra.mxu0 0.0
    %1522 = vmatprep.subr.mxu0 0.0
    %1523 = vmatpush1.xpose.msra.mxu0 0.0
    %1524 = vmatprep.subr.mxu0 0.0
    %1525 = vmatpush1.xpose.msra.mxu0 0.0
    %1526 = vmatprep.subr.mxu0 0.0
    %1527 = vmatpush1.xpose.msra.mxu0 0.0
    %1528 = vmatprep.subr.mxu0 0.0
    %1529 = vmatpush1.xpose.msra.mxu0 0.0
    %1530 = vmatprep.subr.mxu0 0.0
    %1531 = vmatpush1.xpose.msra.mxu0 0.0
    %1532 = vmatprep.subr.mxu0 0.0
    %1533 = vmatpush1.xpose.msra.mxu0 0.0
    %1534 = vmatprep.subr.mxu0 0.0
    %1535 = vmatpush1.xpose.msra.mxu0 0.0
    %1536 = vmatprep.subr.mxu0 0.0
    %1537 = vmatpush1.xpose.msra.mxu0 0.0
    %1538 = vmatprep.subr.mxu0 0.0
    %1539 = vmatpush1.xpose.msra.mxu0 0.0
    %1540 = vmatprep.subr.mxu0 0.0
    %1541 = vmatpush1.xpose.msra.mxu0 0.0
    %1542 = vmatprep.subr.mxu0 0.0
    %1543 = vmatpush1.xpose.msra.mxu0 0.0
    %1544 = vmatprep.subr.mxu0 0.0
    %1545 = vmatpush1.xpose.msra.mxu0 0.0
    %1546 = vmatprep.subr.mxu0 0.0
    %1547 = vmatpush1.xpose.msra.mxu0 0.0
    %1548 = vmatprep.subr.mxu0 0.0
    %1549 = vmatpush1.xpose.msra.mxu0 0.0
    %1550 = vmatprep.subr.mxu0 0.0
    %1551 = vmatpush1.xpose.msra.mxu0 0.0
    %1552 = vmatprep.subr.mxu0 0.0
    %1553 = vmatpush1.xpose.msra.mxu0 0.0
    %1554 = vmatprep.mubr.f32.mxu0 0.0
    %1555 = vmatmul.mubr.f32.gmra.mrb[0].mxu0 %v1488
    %v1556 = vpop.f32.mrb[0].mxu0
    %v1557 = vadd.f32 0.0, %v1556
    %v1558 = vpop.f32.mrb[0].mxu0
    %1559 = vmatprep.mubr.f32.mxu0 0.0
    %1560 = vmatmul.mubr.f32.gmra.mrb[0].mxu0 %v1489
    %v1561 = vpop.f32.mrb[0].mxu0
    %v1562 = vadd.f32 0.0, %v1561
    %v1563 = vpop.f32.mrb[0].mxu0
    %1564 = vdwg.mxu0
    %v1565 = vmul.f32 %v1557, 0.25
    %v1566 = vmul.f32 %v1562, 0.25
    %v1567 = vadd.f32 %v1565, %v128
    %v1568 = vadd.f32 %v1566, %v129
    %v1569 = vsel %vm472, %v1567, -inf
    %1570 = vmax.xlane.f32.xlu0 %v1569
    %v1571 = vpop.xlane.xlu0 %1570
    %v1572 = vsel %vm472, %v1568, -inf
    %1573 = vmax.xlane.f32.xlu0 %v1572
    %v1574 = vpop.xlane.xlu0 %1573
    %v1575 = vsub.f32 %v1567, %v1571
    %v1576 = vsub.f32 %v1568, %v1574
    %v1577 = vmul.f32 %v1575, 1.442695
    %v1578 = vpow.pop %v1577
    %v1579 = vmul.f32 %v1576, 1.442695
    %v1580 = vpow.pop %v1579
    %v1581 = vsel %vm472, %v1578, 0.0
    %1582 = vadd.xlane.f32.xlu0 %v1581
    %v1583 = vpop.xlane.xlu0 %1582
    %v1584 = vsel %vm472, %v1580, 0.0
    %1585 = vadd.xlane.f32.xlu0 %v1584
    %v1586 = vpop.xlane.xlu0 %1585
    %v1587 = vrcp.pop %v1583
    %v1588 = vrcp.pop %v1586
    %v1589 = vmul.f32 %v1578, %v1587
    %v1590 = vmul.f32 %v1580, %v1588
    %v1591 = vmul.f32 %v1375, %v127
    %v1592 = vmul.f32 %v1380, %v127
    %v1594 = vsel %vm472, %v1589, 0
    %v1597 = vsel %vm472, %v1590, 0
    %1599 = vmatprep.subr.mxu0 0.0
    %1600 = vmatpush1.msra.mxu0 %v1591
    %1601 = vmatprep.subr.mxu0 0.0
    %1602 = vmatpush1.msra.mxu0 %v1592
    %1603 = vmatprep.subr.mxu0 0.0
    %1604 = vmatpush1.msra.mxu0 0.0
    %1605 = vmatprep.subr.mxu0 0.0
    %1606 = vmatpush1.msra.mxu0 0.0
    %1607 = vmatprep.subr.mxu0 0.0
    %1608 = vmatpush1.msra.mxu0 0.0
    %1609 = vmatprep.subr.mxu0 0.0
    %1610 = vmatpush1.msra.mxu0 0.0
    %1611 = vmatprep.subr.mxu0 0.0
    %1612 = vmatpush1.msra.mxu0 0.0
    %1613 = vmatprep.subr.mxu0 0.0
    %1614 = vmatpush1.msra.mxu0 0.0
    %1615 = vmatprep.subr.mxu0 0.0
    %1616 = vmatpush1.msra.mxu0 0.0
    %1617 = vmatprep.subr.mxu0 0.0
    %1618 = vmatpush1.msra.mxu0 0.0
    %1619 = vmatprep.subr.mxu0 0.0
    %1620 = vmatpush1.msra.mxu0 0.0
    %1621 = vmatprep.subr.mxu0 0.0
    %1622 = vmatpush1.msra.mxu0 0.0
    %1623 = vmatprep.subr.mxu0 0.0
    %1624 = vmatpush1.msra.mxu0 0.0
    %1625 = vmatprep.subr.mxu0 0.0
    %1626 = vmatpush1.msra.mxu0 0.0
    %1627 = vmatprep.subr.mxu0 0.0
    %1628 = vmatpush1.msra.mxu0 0.0
    %1629 = vmatprep.subr.mxu0 0.0
    %1630 = vmatpush1.msra.mxu0 0.0
    %1631 = vmatprep.subr.mxu0 0.0
    %1632 = vmatpush1.msra.mxu0 0.0
    %1633 = vmatprep.subr.mxu0 0.0
    %1634 = vmatpush1.msra.mxu0 0.0
    %1635 = vmatprep.subr.mxu0 0.0
    %1636 = vmatpush1.msra.mxu0 0.0
    %1637 = vmatprep.subr.mxu0 0.0
    %1638 = vmatpush1.msra.mxu0 0.0
    %1639 = vmatprep.subr.mxu0 0.0
    %1640 = vmatpush1.msra.mxu0 0.0
    %1641 = vmatprep.subr.mxu0 0.0
    %1642 = vmatpush1.msra.mxu0 0.0
    %1643 = vmatprep.subr.mxu0 0.0
    %1644 = vmatpush1.msra.mxu0 0.0
    %1645 = vmatprep.subr.mxu0 0.0
    %1646 = vmatpush1.msra.mxu0 0.0
    %1647 = vmatprep.subr.mxu0 0.0
    %1648 = vmatpush1.msra.mxu0 0.0
    %1649 = vmatprep.subr.mxu0 0.0
    %1650 = vmatpush1.msra.mxu0 0.0
    %1651 = vmatprep.subr.mxu0 0.0
    %1652 = vmatpush1.msra.mxu0 0.0
    %1653 = vmatprep.subr.mxu0 0.0
    %1654 = vmatpush1.msra.mxu0 0.0
    %1655 = vmatprep.subr.mxu0 0.0
    %1656 = vmatpush1.msra.mxu0 0.0
    %1657 = vmatprep.subr.mxu0 0.0
    %1658 = vmatpush1.msra.mxu0 0.0
    %1659 = vmatprep.subr.mxu0 0.0
    %1660 = vmatpush1.msra.mxu0 0.0
    %1661 = vmatprep.subr.mxu0 0.0
    %1662 = vmatpush1.msra.mxu0 0.0
    %1663 = vmatprep.mubr.f32.mxu0 0.0
    %1664 = vmatmul.mubr.f32.gmra.mrb[0].mxu0 %v1594
    %v1665 = vpop.f32.mrb[0].mxu0
    %v1666 = vadd.f32 0.0, %v1665
    %v1667 = vpop.f32.mrb[0].mxu0
    %1668 = vmatprep.mubr.f32.mxu0 0.0
    %1669 = vmatmul.mubr.f32.gmra.mrb[0].mxu0 %v1597
    %v1670 = vpop.f32.mrb[0].mxu0
    %v1671 = vadd.f32 0.0, %v1670
    %v1672 = vpop.f32.mrb[0].mxu0
    %1673 = vdwg.mxu0
    %v1675 = vsel %vm472, %v1484, 0
    %v1678 = vsel %vm472, %v1485, 0
    %1680 = vmatprep.subr.mxu0 0.0
    %1681 = vmatpush1.msra.mxu0 %v1486
    %1682 = vmatprep.subr.mxu0 0.0
    %1683 = vmatpush1.msra.mxu0 %v1487
    %1684 = vmatprep.subr.mxu0 0.0
    %1685 = vmatpush1.msra.mxu0 0.0
    %1686 = vmatprep.subr.mxu0 0.0
    %1687 = vmatpush1.msra.mxu0 0.0
    %1688 = vmatprep.subr.mxu0 0.0
    %1689 = vmatpush1.msra.mxu0 0.0
    %1690 = vmatprep.subr.mxu0 0.0
    %1691 = vmatpush1.msra.mxu0 0.0
    %1692 = vmatprep.subr.mxu0 0.0
    %1693 = vmatpush1.msra.mxu0 0.0
    %1694 = vmatprep.subr.mxu0 0.0
    %1695 = vmatpush1.msra.mxu0 0.0
    %1696 = vmatprep.subr.mxu0 0.0
    %1697 = vmatpush1.msra.mxu0 0.0
    %1698 = vmatprep.subr.mxu0 0.0
    %1699 = vmatpush1.msra.mxu0 0.0
    %1700 = vmatprep.subr.mxu0 0.0
    %1701 = vmatpush1.msra.mxu0 0.0
    %1702 = vmatprep.subr.mxu0 0.0
    %1703 = vmatpush1.msra.mxu0 0.0
    %1704 = vmatprep.subr.mxu0 0.0
    %1705 = vmatpush1.msra.mxu0 0.0
    %1706 = vmatprep.subr.mxu0 0.0
    %1707 = vmatpush1.msra.mxu0 0.0
    %1708 = vmatprep.subr.mxu0 0.0
    %1709 = vmatpush1.msra.mxu0 0.0
    %1710 = vmatprep.subr.mxu0 0.0
    %1711 = vmatpush1.msra.mxu0 0.0
    %1712 = vmatprep.subr.mxu0 0.0
    %1713 = vmatpush1.msra.mxu0 0.0
    %1714 = vmatprep.subr.mxu0 0.0
    %1715 = vmatpush1.msra.mxu0 0.0
    %1716 = vmatprep.subr.mxu0 0.0
    %1717 = vmatpush1.msra.mxu0 0.0
    %1718 = vmatprep.subr.mxu0 0.0
    %1719 = vmatpush1.msra.mxu0 0.0
    %1720 = vmatprep.subr.mxu0 0.0
    %1721 = vmatpush1.msra.mxu0 0.0
    %1722 = vmatprep.subr.mxu0 0.0
    %1723 = vmatpush1.msra.mxu0 0.0
    %1724 = vmatprep.subr.mxu0 0.0
    %1725 = vmatpush1.msra.mxu0 0.0
    %1726 = vmatprep.subr.mxu0 0.0
    %1727 = vmatpush1.msra.mxu0 0.0
    %1728 = vmatprep.subr.mxu0 0.0
    %1729 = vmatpush1.msra.mxu0 0.0
    %1730 = vmatprep.subr.mxu0 0.0
    %1731 = vmatpush1.msra.mxu0 0.0
    %1732 = vmatprep.subr.mxu0 0.0
    %1733 = vmatpush1.msra.mxu0 0.0
    %1734 = vmatprep.subr.mxu0 0.0
    %1735 = vmatpush1.msra.mxu0 0.0
    %1736 = vmatprep.subr.mxu0 0.0
    %1737 = vmatpush1.msra.mxu0 0.0
    %1738 = vmatprep.subr.mxu0 0.0
    %1739 = vmatpush1.msra.mxu0 0.0
    %1740 = vmatprep.subr.mxu0 0.0
    %1741 = vmatpush1.msra.mxu0 0.0
    %1742 = vmatprep.subr.mxu0 0.0
    %1743 = vmatpush1.msra.mxu0 0.0
    %1744 = vmatprep.mubr.f32.mxu0 0.0
    %1745 = vmatmul.mubr.f32.gmra.mrb[0].mxu0 %v1675
    %v1746 = vpop.f32.mrb[0].mxu0
    %v1747 = vadd.f32 %v1666, %v1746
    %v1748 = vpop.f32.mrb[0].mxu0
    %1749 = vmatprep.mubr.f32.mxu0 0.0
    %1750 = vmatmul.mubr.f32.gmra.mrb[0].mxu0 %v1678
    %v1751 = vpop.f32.mrb[0].mxu0
    %v1752 = vadd.f32 %v1671, %v1751
    %v1753 = vpop.f32.mrb[0].mxu0
    %1754 = vdwg.mxu0
    %s1755 = scalar_lea.vmem %s6, 128
    %v1756 = vld [vmem:[%s1755] sm:$0xff]
    %v1757 = vld [vmem:[%s1755 + $0x8] sm:$0xff]
    %v1758 = vld [vmem:[%s1755 + $0x10] sm:$0xff]
    %v1759 = vld [vmem:[%s1755 + $0x18] sm:$0xff]
    %v1760 = vld [vmem:[%s1755 + $0x20] sm:$0xff]
    %v1761 = vld [vmem:[%s1755 + $0x28] sm:$0xff]
    %v1762 = vld [vmem:[%s1755 + $0x30] sm:$0xff]
    %v1763 = vld [vmem:[%s1755 + $0x38] sm:$0xff]
    %v1764 = vld [vmem:[%s1755 + $0x40] sm:$0xff]
    %v1765 = vld [vmem:[%s1755 + $0x48] sm:$0xff]
    %v1766 = vld [vmem:[%s1755 + $0x50] sm:$0xff]
    %v1767 = vld [vmem:[%s1755 + $0x58] sm:$0xff]
    %v1768 = vld [vmem:[%s1755 + $0x60] sm:$0xff]
    %v1769 = vld [vmem:[%s1755 + $0x68] sm:$0xff]
    %v1770 = vld [vmem:[%s1755 + $0x70] sm:$0xff]
    %v1771 = vld [vmem:[%s1755 + $0x78] sm:$0xff]
    %s1772 = scalar_lea.vmem %s7, 1
    %v1773 = vld [vmem:[%s1772] sm:$0x1]
    %v1775 = vlaneseq
    %v1776 = vshrl.u32 %v1775, 7
    %v1777 = vsub.s32 0, %v1776
    %v1778 = vrot.slane %v1773, %v1777
    %1780 = vmatprep.subr.mxu0 0.0
    %1781 = vmatpush1.msra.mxu0 %v1756
    %1782 = vmatprep.subr.mxu0 0.0
    %1783 = vmatpush1.msra.mxu0 %v1757
    %1784 = vmatprep.subr.mxu0 0.0
    %1785 = vmatpush1.msra.mxu0 %v1758
    %1786 = vmatprep.subr.mxu0 0.0
    %1787 = vmatpush1.msra.mxu0 %v1759
    %1788 = vmatprep.subr.mxu0 0.0
    %1789 = vmatpush1.msra.mxu0 %v1760
    %1790 = vmatprep.subr.mxu0 0.0
    %1791 = vmatpush1.msra.mxu0 %v1761
    %1792 = vmatprep.subr.mxu0 0.0
    %1793 = vmatpush1.msra.mxu0 %v1762
    %1794 = vmatprep.subr.mxu0 0.0
    %1795 = vmatpush1.msra.mxu0 %v1763
    %1796 = vmatprep.subr.mxu0 0.0
    %1797 = vmatpush1.msra.mxu0 %v1764
    %1798 = vmatprep.subr.mxu0 0.0
    %1799 = vmatpush1.msra.mxu0 %v1765
    %1800 = vmatprep.subr.mxu0 0.0
    %1801 = vmatpush1.msra.mxu0 %v1766
    %1802 = vmatprep.subr.mxu0 0.0
    %1803 = vmatpush1.msra.mxu0 %v1767
    %1804 = vmatprep.subr.mxu0 0.0
    %1805 = vmatpush1.msra.mxu0 %v1768
    %1806 = vmatprep.subr.mxu0 0.0
    %1807 = vmatpush1.msra.mxu0 %v1769
    %1808 = vmatprep.subr.mxu0 0.0
    %1809 = vmatpush1.msra.mxu0 %v1770
    %1810 = vmatprep.subr.mxu0 0.0
    %1811 = vmatpush1.msra.mxu0 %v1771
    %1812 = vmatprep.subr.mxu0 0.0
    %1813 = vmatpush1.msra.mxu0 0.0
    %1814 = vmatprep.subr.mxu0 0.0
    %1815 = vmatpush1.msra.mxu0 0.0
    %1816 = vmatprep.subr.mxu0 0.0
    %1817 = vmatpush1.msra.mxu0 0.0
    %1818 = vmatprep.subr.mxu0 0.0
    %1819 = vmatpush1.msra.mxu0 0.0
    %1820 = vmatprep.subr.mxu0 0.0
    %1821 = vmatpush1.msra.mxu0 0.0
    %1822 = vmatprep.subr.mxu0 0.0
    %1823 = vmatpush1.msra.mxu0 0.0
    %1824 = vmatprep.subr.mxu0 0.0
    %1825 = vmatpush1.msra.mxu0 0.0
    %1826 = vmatprep.subr.mxu0 0.0
    %1827 = vmatpush1.msra.mxu0 0.0
    %1828 = vmatprep.subr.mxu0 0.0
    %1829 = vmatpush1.msra.mxu0 0.0
    %1830 = vmatprep.subr.mxu0 0.0
    %1831 = vmatpush1.msra.mxu0 0.0
    %1832 = vmatprep.subr.mxu0 0.0
    %1833 = vmatpush1.msra.mxu0 0.0
    %1834 = vmatprep.subr.mxu0 0.0
    %1835 = vmatpush1.msra.mxu0 0.0
    %1836 = vmatprep.subr.mxu0 0.0
    %1837 = vmatpush1.msra.mxu0 0.0
    %1838 = vmatprep.subr.mxu0 0.0
    %1839 = vmatpush1.msra.mxu0 0.0
    %1840 = vmatprep.subr.mxu0 0.0
    %1841 = vmatpush1.msra.mxu0 0.0
    %1842 = vmatprep.subr.mxu0 0.0
    %1843 = vmatpush1.msra.mxu0 0.0
    %1844 = vmatprep.mubr.f32.mxu0 0.0
    %1845 = vmatmul.mubr.f32.gmra.mrb[0].mxu0 %v1747
    %v1846 = vpop.f32.mrb[0].mxu0
    %v1847 = vadd.f32 %v1778, %v1846
    %v1848 = vpop.f32.mrb[0].mxu0
    %1849 = vmatprep.mubr.f32.mxu0 0.0
    %1850 = vmatmul.mubr.f32.gmra.mrb[0].mxu0 %v1752
    %v1851 = vpop.f32.mrb[0].mxu0
    %v1852 = vadd.f32 %v1778, %v1851
    %v1853 = vpop.f32.mrb[0].mxu0
    %1854 = vdwg.mxu0
    %v1855 = vadd.f32 %v1162, %v1847
    %v1856 = vadd.f32 %v1163, %v1852
    %s1857 = scalar_lea.vmem %s8, 1
    %v1858 = vld [vmem:[%s1857] sm:$0x1]
    %s1859 = scalar_lea.vmem %s9, 1
    %v1860 = vld [vmem:[%s1859] sm:$0x1]
    %1861 = vadd.xlane.f32.xlu0 %v1855
    %v1862 = vpop.xlane.xlu0 %1861
    %1863 = vadd.xlane.f32.xlu0 %v1856
    %v1864 = vpop.xlane.xlu0 %1863
    %v1865 = vmul.f32 %v1862, 0.03125
    %v1866 = vmul.f32 %v1864, 0.03125
    %v1867 = vsub.f32 %v1855, %v1865
    %v1868 = vsub.f32 %v1856, %v1866
    %v1869 = vmul.f32 %v1867, %v118
    %v1870 = vmul.f32 %v1868, %v118
    %v1871 = vmul.f32 %v1869, %v1869
    %v1872 = vmul.f32 %v1870, %v1870
    %1873 = vadd.xlane.f32.xlu0 %v1871
    %v1874 = vpop.xlane.xlu0 %1873
    %1875 = vadd.xlane.f32.xlu0 %v1872
    %v1876 = vpop.xlane.xlu0 %1875
    %v1877 = vmul.f32 %v1874, 0.03125
    %v1878 = vmul.f32 %v1876, 0.03125
    %v1879 = vadd.f32 %v1877, 1e-12
    %v1880 = vadd.f32 %v1878, 1e-12
    %v1881 = vrsqrt.pop %v1879
    %v1882 = vrsqrt.pop %v1880
    %v1883 = vmul.f32 %v1869, %v1881
    %v1884 = vmul.f32 %v1870, %v1882
    %v1886 = vlaneseq
    %v1887 = vshrl.u32 %v1886, 7
    %v1888 = vsub.s32 0, %v1887
    %v1889 = vrot.slane %v1858, %v1888
    %v1891 = vmul.f32 %v1883, %v1889
    %v1892 = vmul.f32 %v1884, %v1889
    %v1894 = vlaneseq
    %v1895 = vshrl.u32 %v1894, 7
    %v1896 = vsub.s32 0, %v1895
    %v1897 = vrot.slane %v1860, %v1896
    %v1899 = vadd.f32 %v1891, %v1897
    %v1900 = vadd.f32 %v1892, %v1897
    %s1901 = scalar_lea.vmem [#allocation4], 128
    %v1902 = vld [vmem:[%s1901] sm:$0xff]
    %v1903 = vld [vmem:[%s1901 + $0x8] sm:$0xff]
    %v1904 = vld [vmem:[%s1901 + $0x10] sm:$0xff]
    %v1905 = vld [vmem:[%s1901 + $0x18] sm:$0xff]
    %v1906 = vld [vmem:[%s1901 + $0x20] sm:$0xff]
    %v1907 = vld [vmem:[%s1901 + $0x28] sm:$0xff]
    %v1908 = vld [vmem:[%s1901 + $0x30] sm:$0xff]
    %v1909 = vld [vmem:[%s1901 + $0x38] sm:$0xff]
    %v1910 = vld [vmem:[%s1901 + $0x40] sm:$0xff]
    %v1911 = vld [vmem:[%s1901 + $0x48] sm:$0xff]
    %v1912 = vld [vmem:[%s1901 + $0x50] sm:$0xff]
    %v1913 = vld [vmem:[%s1901 + $0x58] sm:$0xff]
    %v1914 = vld [vmem:[%s1901 + $0x60] sm:$0xff]
    %v1915 = vld [vmem:[%s1901 + $0x68] sm:$0xff]
    %v1916 = vld [vmem:[%s1901 + $0x70] sm:$0xff]
    %v1917 = vld [vmem:[%s1901 + $0x78] sm:$0xff]
    %s1918 = scalar_lea.vmem %s11, 1
    %v1919 = vld [vmem:[%s1918] sm:$0x1]
    %v1921 = vlaneseq
    %v1922 = vshrl.u32 %v1921, 7
    %v1923 = vsub.s32 0, %v1922
    %v1924 = vrot.slane %v1919, %v1923
    %1926 = vmatprep.subr.mxu0 0.0
    %1927 = vmatpush1.msra.mxu0 %v1902
    %1928 = vmatprep.subr.mxu0 0.0
    %1929 = vmatpush1.msra.mxu0 %v1903
    %1930 = vmatprep.subr.mxu0 0.0
    %1931 = vmatpush1.msra.mxu0 %v1904
    %1932 = vmatprep.subr.mxu0 0.0
    %1933 = vmatpush1.msra.mxu0 %v1905
    %1934 = vmatprep.subr.mxu0 0.0
    %1935 = vmatpush1.msra.mxu0 %v1906
    %1936 = vmatprep.subr.mxu0 0.0
    %1937 = vmatpush1.msra.mxu0 %v1907
    %1938 = vmatprep.subr.mxu0 0.0
    %1939 = vmatpush1.msra.mxu0 %v1908
    %1940 = vmatprep.subr.mxu0 0.0
    %1941 = vmatpush1.msra.mxu0 %v1909
    %1942 = vmatprep.subr.mxu0 0.0
    %1943 = vmatpush1.msra.mxu0 %v1910
    %1944 = vmatprep.subr.mxu0 0.0
    %1945 = vmatpush1.msra.mxu0 %v1911
    %1946 = vmatprep.subr.mxu0 0.0
    %1947 = vmatpush1.msra.mxu0 %v1912
    %1948 = vmatprep.subr.mxu0 0.0
    %1949 = vmatpush1.msra.mxu0 %v1913
    %1950 = vmatprep.subr.mxu0 0.0
    %1951 = vmatpush1.msra.mxu0 %v1914
    %1952 = vmatprep.subr.mxu0 0.0
    %1953 = vmatpush1.msra.mxu0 %v1915
    %1954 = vmatprep.subr.mxu0 0.0
    %1955 = vmatpush1.msra.mxu0 %v1916
    %1956 = vmatprep.subr.mxu0 0.0
    %1957 = vmatpush1.msra.mxu0 %v1917
    %1958 = vmatprep.subr.mxu0 0.0
    %1959 = vmatpush1.msra.mxu0 0.0
    %1960 = vmatprep.subr.mxu0 0.0
    %1961 = vmatpush1.msra.mxu0 0.0
    %1962 = vmatprep.subr.mxu0 0.0
    %1963 = vmatpush1.msra.mxu0 0.0
    %1964 = vmatprep.subr.mxu0 0.0
    %1965 = vmatpush1.msra.mxu0 0.0
    %1966 = vmatprep.subr.mxu0 0.0
    %1967 = vmatpush1.msra.mxu0 0.0
    %1968 = vmatprep.subr.mxu0 0.0
    %1969 = vmatpush1.msra.mxu0 0.0
    %1970 = vmatprep.subr.mxu0 0.0
    %1971 = vmatpush1.msra.mxu0 0.0
    %1972 = vmatprep.subr.mxu0 0.0
    %1973 = vmatpush1.msra.mxu0 0.0
    %1974 = vmatprep.subr.mxu0 0.0
    %1975 = vmatpush1.msra.mxu0 0.0
    %1976 = vmatprep.subr.mxu0 0.0
    %1977 = vmatpush1.msra.mxu0 0.0
    %1978 = vmatprep.subr.mxu0 0.0
    %1979 = vmatpush1.msra.mxu0 0.0
    %1980 = vmatprep.subr.mxu0 0.0
    %1981 = vmatpush1.msra.mxu0 0.0
    %1982 = vmatprep.subr.mxu0 0.0
    %1983 = vmatpush1.msra.mxu0 0.0
    %1984 = vmatprep.subr.mxu0 0.0
    %1985 = vmatpush1.msra.mxu0 0.0
    %1986 = vmatprep.subr.mxu0 0.0
    %1987 = vmatpush1.msra.mxu0 0.0
    %1988 = vmatprep.subr.mxu0 0.0
    %1989 = vmatpush1.msra.mxu0 0.0
    %1990 = vmatprep.mubr.f32.mxu0 0.0
    %1991 = vmatmul.mubr.f32.gmra.mrb[0].mxu0 %v1899
    %v1992 = vpop.f32.mrb[0].mxu0
    %v1993 = vadd.f32 %v1924, %v1992
    %v1994 = vpop.f32.mrb[0].mxu0
    %1995 = vmatprep.mubr.f32.mxu0 0.0
    %1996 = vmatmul.mubr.f32.gmra.mrb[0].mxu0 %v1900
    %v1997 = vpop.f32.mrb[0].mxu0
    %v1998 = vadd.f32 %v1924, %v1997
    %v1999 = vpop.f32.mrb[0].mxu0
    %2000 = vdwg.mxu0
    %v2001 = vmul.f32 %v1993, %v1993
    %v2002 = vmul.f32 %v1998, %v1998
    %v2003 = vmul.f32 %v1993, %v2001
    %v2004 = vmul.f32 %v1998, %v2002
    %v2005 = vmul.f32 %v2003, 0.044715
    %v2006 = vmul.f32 %v2004, 0.044715
    %v2007 = vadd.f32 %v1993, %v2005
    %v2008 = vadd.f32 %v1998, %v2006
    %v2009 = vmul.f32 %v2007, 0.7978846
    %v2010 = vmul.f32 %v2008, 0.7978846
    %v2011 = vtanh.pop %v2009
    %v2012 = vtanh.pop %v2010
    %v2013 = vadd.f32 %v2011, 1.0
    %v2014 = vadd.f32 %v2012, 1.0
    %v2015 = vmul.f32 %v2013, 0.5
    %v2016 = vmul.f32 %v2014, 0.5
    %v2017 = vmul.f32 %v1993, %v2015
    %v2018 = vmul.f32 %v1998, %v2016
    %s2019 = scalar_lea.vmem [#allocation6], 128
    %v2020 = vld [vmem:[%s2019] sm:$0xff]
    %v2021 = vld [vmem:[%s2019 + $0x8] sm:$0xff]
    %v2022 = vld [vmem:[%s2019 + $0x10] sm:$0xff]
    %v2023 = vld [vmem:[%s2019 + $0x18] sm:$0xff]
    %v2024 = vld [vmem:[%s2019 + $0x20] sm:$0xff]
    %v2025 = vld [vmem:[%s2019 + $0x28] sm:$0xff]
    %v2026 = vld [vmem:[%s2019 + $0x30] sm:$0xff]
    %v2027 = vld [vmem:[%s2019 + $0x38] sm:$0xff]
    %v2028 = vld [vmem:[%s2019 + $0x40] sm:$0xff]
    %v2029 = vld [vmem:[%s2019 + $0x48] sm:$0xff]
    %v2030 = vld [vmem:[%s2019 + $0x50] sm:$0xff]
    %v2031 = vld [vmem:[%s2019 + $0x58] sm:$0xff]
    %v2032 = vld [vmem:[%s2019 + $0x60] sm:$0xff]
    %v2033 = vld [vmem:[%s2019 + $0x68] sm:$0xff]
    %v2034 = vld [vmem:[%s2019 + $0x70] sm:$0xff]
    %v2035 = vld [vmem:[%s2019 + $0x78] sm:$0xff]
    %s2036 = scalar_lea.vmem %s13, 1
    %v2037 = vld [vmem:[%s2036] sm:$0x1]
    %v2039 = vlaneseq
    %v2040 = vshrl.u32 %v2039, 7
    %v2041 = vsub.s32 0, %v2040
    %v2042 = vrot.slane %v2037, %v2041
    %2044 = vmatprep.subr.mxu0 0.0
    %2045 = vmatpush1.msra.mxu0 %v2020
    %2046 = vmatprep.subr.mxu0 0.0
    %2047 = vmatpush1.msra.mxu0 %v2021
    %2048 = vmatprep.subr.mxu0 0.0
    %2049 = vmatpush1.msra.mxu0 %v2022
    %2050 = vmatprep.subr.mxu0 0.0
    %2051 = vmatpush1.msra.mxu0 %v2023
    %2052 = vmatprep.subr.mxu0 0.0
    %2053 = vmatpush1.msra.mxu0 %v2024
    %2054 = vmatprep.subr.mxu0 0.0
    %2055 = vmatpush1.msra.mxu0 %v2025
    %2056 = vmatprep.subr.mxu0 0.0
    %2057 = vmatpush1.msra.mxu0 %v2026
    %2058 = vmatprep.subr.mxu0 0.0
    %2059 = vmatpush1.msra.mxu0 %v2027
    %2060 = vmatprep.subr.mxu0 0.0
    %2061 = vmatpush1.msra.mxu0 %v2028
    %2062 = vmatprep.subr.mxu0 0.0
    %2063 = vmatpush1.msra.mxu0 %v2029
    %2064 = vmatprep.subr.mxu0 0.0
    %2065 = vmatpush1.msra.mxu0 %v2030
    %2066 = vmatprep.subr.mxu0 0.0
    %2067 = vmatpush1.msra.mxu0 %v2031
    %2068 = vmatprep.subr.mxu0 0.0
    %2069 = vmatpush1.msra.mxu0 %v2032
    %2070 = vmatprep.subr.mxu0 0.0
    %2071 = vmatpush1.msra.mxu0 %v2033
    %2072 = vmatprep.subr.mxu0 0.0
    %2073 = vmatpush1.msra.mxu0 %v2034
    %2074 = vmatprep.subr.mxu0 0.0
    %2075 = vmatpush1.msra.mxu0 %v2035
    %2076 = vmatprep.subr.mxu0 0.0
    %2077 = vmatpush1.msra.mxu0 0.0
    %2078 = vmatprep.subr.mxu0 0.0
    %2079 = vmatpush1.msra.mxu0 0.0
    %2080 = vmatprep.subr.mxu0 0.0
    %2081 = vmatpush1.msra.mxu0 0.0
    %2082 = vmatprep.subr.mxu0 0.0
    %2083 = vmatpush1.msra.mxu0 0.0
    %2084 = vmatprep.subr.mxu0 0.0
    %2085 = vmatpush1.msra.mxu0 0.0
    %2086 = vmatprep.subr.mxu0 0.0
    %2087 = vmatpush1.msra.mxu0 0.0
    %2088 = vmatprep.subr.mxu0 0.0
    %2089 = vmatpush1.msra.mxu0 0.0
    %2090 = vmatprep.subr.mxu0 0.0
    %2091 = vmatpush1.msra.mxu0 0.0
    %2092 = vmatprep.subr.mxu0 0.0
    %2093 = vmatpush1.msra.mxu0 0.0
    %2094 = vmatprep.subr.mxu0 0.0
    %2095 = vmatpush1.msra.mxu0 0.0
    %2096 = vmatprep.subr.mxu0 0.0
    %2097 = vmatpush1.msra.mxu0 0.0
    %2098 = vmatprep.subr.mxu0 0.0
    %2099 = vmatpush1.msra.mxu0 0.0
    %2100 = vmatprep.subr.mxu0 0.0
    %2101 = vmatpush1.msra.mxu0 0.0
    %2102 = vmatprep.subr.mxu0 0.0
    %2103 = vmatpush1.msra.mxu0 0.0
    %2104 = vmatprep.subr.mxu0 0.0
    %2105 = vmatpush1.msra.mxu0 0.0
    %2106 = vmatprep.subr.mxu0 0.0
    %2107 = vmatpush1.msra.mxu0 0.0
    %2108 = vmatprep.mubr.f32.mxu0 0.0
    %2109 = vmatmul.mubr.f32.gmra.mrb[0].mxu0 %v2017
    %v2110 = vpop.f32.mrb[0].mxu0
    %v2111 = vadd.f32 %v2042, %v2110
    %v2112 = vpop.f32.mrb[0].mxu0
    %2113 = vmatprep.mubr.f32.mxu0 0.0
    %2114 = vmatmul.mubr.f32.gmra.mrb[0].mxu0 %v2018
    %v2115 = vpop.f32.mrb[0].mxu0
    %v2116 = vadd.f32 %v2042, %v2115
    %v2117 = vpop.f32.mrb[0].mxu0
    %2118 = vdwg.mxu0
    %v2119 = vadd.f32 %v1899, %v2111
    %v2120 = vadd.f32 %v1900, %v2116
    %s2121 = scalar_lea.vmem %s14, 1
    %v2122 = vld [vmem:[%s2121] sm:$0x1]
    %s2123 = scalar_lea.vmem %s15, 1
    %v2124 = vld [vmem:[%s2123] sm:$0x1]
    %2125 = vadd.xlane.f32.xlu0 %v2119
    %v2126 = vpop.xlane.xlu0 %2125
    %2127 = vadd.xlane.f32.xlu0 %v2120
    %v2128 = vpop.xlane.xlu0 %2127
    %v2129 = vmul.f32 %v2126, 0.03125
    %v2130 = vmul.f32 %v2128, 0.03125
    %v2131 = vsub.f32 %v2119, %v2129
    %v2132 = vsub.f32 %v2120, %v2130
    %v2133 = vmul.f32 %v2131, %v118
    %v2134 = vmul.f32 %v2132, %v118
    %v2135 = vmul.f32 %v2133, %v2133
    %v2136 = vmul.f32 %v2134, %v2134
    %2137 = vadd.xlane.f32.xlu0 %v2135
    %v2138 = vpop.xlane.xlu0 %2137
    %2139 = vadd.xlane.f32.xlu0 %v2136
    %v2140 = vpop.xlane.xlu0 %2139
    %v2141 = vmul.f32 %v2138, 0.03125
    %v2142 = vmul.f32 %v2140, 0.03125
    %v2143 = vadd.f32 %v2141, 1e-12
    %v2144 = vadd.f32 %v2142, 1e-12
    %v2145 = vrsqrt.pop %v2143
    %v2146 = vrsqrt.pop %v2144
    %v2147 = vmul.f32 %v2133, %v2145
    %v2148 = vmul.f32 %v2134, %v2146
    %v2150 = vlaneseq
    %v2151 = vshrl.u32 %v2150, 7
    %v2152 = vsub.s32 0, %v2151
    %v2153 = vrot.slane %v2122, %v2152
    %v2155 = vmul.f32 %v2147, %v2153
    %v2156 = vmul.f32 %v2148, %v2153
    %v2158 = vlaneseq
    %v2159 = vshrl.u32 %v2158, 7
    %v2160 = vsub.s32 0, %v2159
    %v2161 = vrot.slane %v2124, %v2160
    %v2163 = vadd.f32 %v2155, %v2161
    %v2164 = vadd.f32 %v2156, %v2161
    %v2165 = vld [vmem:[#allocation7] sm:$0xff]
    %v2166 = vld [vmem:[#allocation7 + $0x8] sm:$0xff]
    %v2167 = vld [vmem:[#allocation7 + $0x10] sm:$0xff]
    %v2168 = vld [vmem:[#allocation7 + $0x18] sm:$0xff]
    %v2169 = vld [vmem:[#allocation7 + $0x20] sm:$0xff]
    %v2170 = vld [vmem:[#allocation7 + $0x28] sm:$0xff]
    %v2171 = vld [vmem:[#allocation7 + $0x30] sm:$0xff]
    %v2172 = vld [vmem:[#allocation7 + $0x38] sm:$0xff]
    %v2173 = vld [vmem:[#allocation7 + $0x40] sm:$0xff]
    %v2174 = vld [vmem:[#allocation7 + $0x48] sm:$0xff]
    %v2175 = vld [vmem:[#allocation7 + $0x50] sm:$0xff]
    %v2176 = vld [vmem:[#allocation7 + $0x58] sm:$0xff]
    %v2177 = vld [vmem:[#allocation7 + $0x60] sm:$0xff]
    %v2178 = vld [vmem:[#allocation7 + $0x68] sm:$0xff]
    %v2179 = vld [vmem:[#allocation7 + $0x70] sm:$0xff]
    %v2180 = vld [vmem:[#allocation7 + $0x78] sm:$0xff]
    %v2181 = vld [vmem:[%s17] sm:$0x1]
    %v2183 = vlaneseq
    %v2184 = vshrl.u32 %v2183, 7
    %v2185 = vsub.s32 0, %v2184
    %v2186 = vrot.slane %v2181, %v2185
    %2188 = vmatprep.subr.mxu0 0.0
    %2189 = vmatpush1.msra.mxu0 %v2165
    %2190 = vmatprep.subr.mxu0 0.0
    %2191 = vmatpush1.msra.mxu0 %v2166
    %2192 = vmatprep.subr.mxu0 0.0
    %2193 = vmatpush1.msra.mxu0 %v2167
    %2194 = vmatprep.subr.mxu0 0.0
    %2195 = vmatpush1.msra.mxu0 %v2168
    %2196 = vmatprep.subr.mxu0 0.0
    %2197 = vmatpush1.msra.mxu0 %v2169
    %2198 = vmatprep.subr.mxu0 0.0
    %2199 = vmatpush1.msra.mxu0 %v2170
    %2200 = vmatprep.subr.mxu0 0.0
    %2201 = vmatpush1.msra.mxu0 %v2171
    %2202 = vmatprep.subr.mxu0 0.0
    %2203 = vmatpush1.msra.mxu0 %v2172
    %2204 = vmatprep.subr.mxu0 0.0
    %2205 = vmatpush1.msra.mxu0 %v2173
    %2206 = vmatprep.subr.mxu0 0.0
    %2207 = vmatpush1.msra.mxu0 %v2174
    %2208 = vmatprep.subr.mxu0 0.0
    %2209 = vmatpush1.msra.mxu0 %v2175
    %2210 = vmatprep.subr.mxu0 0.0
    %2211 = vmatpush1.msra.mxu0 %v2176
    %2212 = vmatprep.subr.mxu0 0.0
    %2213 = vmatpush1.msra.mxu0 %v2177
    %2214 = vmatprep.subr.mxu0 0.0
    %2215 = vmatpush1.msra.mxu0 %v2178
    %2216 = vmatprep.subr.mxu0 0.0
    %2217 = vmatpush1.msra.mxu0 %v2179
    %2218 = vmatprep.subr.mxu0 0.0
    %2219 = vmatpush1.msra.mxu0 %v2180
    %2220 = vmatprep.subr.mxu0 0.0
    %2221 = vmatpush1.msra.mxu0 0.0
    %2222 = vmatprep.subr.mxu0 0.0
    %2223 = vmatpush1.msra.mxu0 0.0
    %2224 = vmatprep.subr.mxu0 0.0
    %2225 = vmatpush1.msra.mxu0 0.0
    %2226 = vmatprep.subr.mxu0 0.0
    %2227 = vmatpush1.msra.mxu0 0.0
    %2228 = vmatprep.subr.mxu0 0.0
    %2229 = vmatpush1.msra.mxu0 0.0
    %2230 = vmatprep.subr.mxu0 0.0
    %2231 = vmatpush1.msra.mxu0 0.0
    %2232 = vmatprep.subr.mxu0 0.0
    %2233 = vmatpush1.msra.mxu0 0.0
    %2234 = vmatprep.subr.mxu0 0.0
    %2235 = vmatpush1.msra.mxu0 0.0
    %2236 = vmatprep.subr.mxu0 0.0
    %2237 = vmatpush1.msra.mxu0 0.0
    %2238 = vmatprep.subr.mxu0 0.0
    %2239 = vmatpush1.msra.mxu0 0.0
    %2240 = vmatprep.subr.mxu0 0.0
    %2241 = vmatpush1.msra.mxu0 0.0
    %2242 = vmatprep.subr.mxu0 0.0
    %2243 = vmatpush1.msra.mxu0 0.0
    %2244 = vmatprep.subr.mxu0 0.0
    %2245 = vmatpush1.msra.mxu0 0.0
    %2246 = vmatprep.subr.mxu0 0.0
    %2247 = vmatpush1.msra.mxu0 0.0
    %2248 = vmatprep.subr.mxu0 0.0
    %2249 = vmatpush1.msra.mxu0 0.0
    %2250 = vmatprep.subr.mxu0 0.0
    %2251 = vmatpush1.msra.mxu0 0.0
    %2252 = vmatprep.mubr.f32.mxu0 0.0
    %2253 = vmatmul.mubr.f32.gmra.mrb[0].mxu0 %v2163
    %v2254 = vpop.f32.mrb[0].mxu0
    %v2255 = vadd.f32 %v2186, %v2254
    %v2256 = vpop.f32.mrb[0].mxu0
    %2257 = vmatprep.mubr.f32.mxu0 0.0
    %2258 = vmatmul.mubr.f32.gmra.mrb[0].mxu0 %v2164
    %v2259 = vpop.f32.mrb[0].mxu0
    %v2260 = vadd.f32 %v2186, %v2259
    %v2261 = vpop.f32.mrb[0].mxu0
    %2262 = vdwg.mxu0
    %2263 = vst [vmem:[%s18] sm:$0xff] %v2255
    %2264 = vst [vmem:[%s18 + $0x8] sm:$0xff] %v2260
    // Predicated region
    $region90: #{forward.1} parent=1 // pred_check
      _
    $region91: #{forward.1} parent=1 // pred_check_branch
      %2266 = sbr.rel (0) target = $region93
    $region92: #{forward.1} parent=1 // pred_region
      _
    $region93: #{forward.1} parent=1 // pred_fallthru
      _
    // Predicated region
    $region94: #{forward.1} parent=1 // pred_check
      _
    $region95: #{forward.1} parent=1 // pred_check_branch
      %2268 = sbr.rel (0) target = $region97
    $region96: #{forward.1} parent=1 // pred_region
      _
    $region97: #{forward.1} parent=1 // pred_fallthru
      _
    %2269 = vsyncpa [#allocation3], 1
    %2270 = vsyncpa [#allocation5], 1
    %2271 = vsyncpa [#allocation8], 1

</llo_original>
